<compile_context>
chip_gen: v7x
topology: tpu7x:2x2x1
jax: 0.10.0
libtpu: 0.0.40
codegen_flags: <defaults>
</compile_context>

<pallas_src>
import functools
import math

import jax
import jax.numpy as jnp
from jax.experimental import pallas as pl
from jax.experimental.pallas import tpu as pltpu

LN_EPS = 1e-5


# ----------------------------- VMEM budget -----------------------------------

def _default_vmem_limit():
    # v7x has 64 MiB VMEM per TensorCore (v5e/v6e: 128 MiB). Leave ~25% headroom for
    # compiler scratch / pipeline buffers rather than requesting all of physical VMEM.
    cap = 128 * 1024 * 1024
    try:
        cap = int(pltpu.get_tpu_info().vmem_capacity_bytes)
    except Exception:
        cap = 64 * 1024 * 1024  # conservative fallback (v7x-sized)
    return min((cap * 3) // 4, 96 * 1024 * 1024)


VMEM_LIMIT = _default_vmem_limit()


# -------------------- single-buffered weight BlockSpecs -----------------------

_BUFFERED1_OK = None


def _probe_buffered1():
    """Check (once, on tiny shapes) that pipeline_mode=pl.Buffered(1) is supported."""
    try:
        def _k(x_ref, w_ref, o_ref):
            o_ref[...] = x_ref[...] + w_ref[0]

        f = pl.pallas_call(
            _k,
            out_shape=jax.ShapeDtypeStruct((16, 128), jnp.float32),
            grid=(2,),
            in_specs=[pl.BlockSpec((8, 128), lambda i: (0, 0),
                                   pipeline_mode=pl.Buffered(1)),
                      pl.BlockSpec((2, 8, 128), lambda i: (0, 0, 0),
                                   pipeline_mode=pl.Buffered(1))],
            out_specs=pl.BlockSpec((8, 128), lambda i: (i, 0)),
        )
        jax.block_until_ready(f(jnp.zeros((8, 128), jnp.float32),
                                jnp.zeros((2, 8, 128), jnp.float32)))
        return True
    except Exception:
        return False


def _wspec(shape):
    """Grid-invariant (weight) BlockSpec; single-buffered when the API allows it."""
    global _BUFFERED1_OK
    if _BUFFERED1_OK is None:
        _BUFFERED1_OK = _probe_buffered1()
    idx = lambda *_: (0,) * len(shape)
    if _BUFFERED1_OK:
        return pl.BlockSpec(shape, idx, pipeline_mode=pl.Buffered(1))
    return pl.BlockSpec(shape, idx)


# ----------------------------- in-kernel helpers -----------------------------

def _layernorm(x, gamma, beta):
    # single reduction pass: var = E[x^2] - mu^2
    mu = jnp.mean(x, axis=-1, keepdims=True)
    var = jnp.mean(x * x, axis=-1, keepdims=True) - mu * mu
    return (x - mu) * jax.lax.rsqrt(var + LN_EPS) * gamma + beta


def _attention_tile(h_ref, m_ref, wq_ref, bq_ref, wk_ref, bk_ref, wv_ref, bv_ref,
                    wo_ref, bo_ref, g_ref, be_ref, k_sc, v_sc, ctx_sc,
                    *, num_heads, tq):
    """Self-attention + output dense + residual + LayerNorm for one query row tile.

    h_ref: (S, H) full activation for this batch row (resident across q tiles).
    K/V are computed once per batch row (q_tile == 0) into persistent VMEM scratch.
    Per-head contexts are assembled into ctx_sc so the output projection is a single
    K = H matmul.
    """
    S, H = h_ref.shape
    dh = H // num_heads
    scale = 1.0 / math.sqrt(dh)
    qi = pl.program_id(1)

    @pl.when(qi == 0)
    def _():
        hb_all = h_ref[...].astype(jnp.bfloat16)                     # (S, H)
        for hd in range(num_heads):
            k_sc[hd] = (jnp.dot(hb_all, wk_ref[hd],
                                preferred_element_type=jnp.float32)
                        + bk_ref[hd]).astype(jnp.bfloat16)           # (S, dh)
            v_sc[hd] = (jnp.dot(hb_all, wv_ref[hd],
                                preferred_element_type=jnp.float32)
                        + bv_ref[hd]).astype(jnp.bfloat16)

    row0 = pl.multiple_of(qi * tq, tq)
    h_tile = h_ref[pl.ds(row0, tq), :]                               # (tq, H) f32
    hb = h_tile.astype(jnp.bfloat16)
    m = m_ref[...]                                                   # (1, S)

    for hd in range(num_heads):
        qh = jnp.dot(hb, wq_ref[hd], preferred_element_type=jnp.float32) + bq_ref[hd]
        # scores = qh @ k_h^T (contract head dims, no explicit transpose op)
        s = jax.lax.dot_general(qh.astype(jnp.bfloat16), k_sc[hd],
                                (((1,), (1,)), ((), ())),
                                preferred_element_type=jnp.float32) * scale + m
        s_max = jnp.max(s, axis=-1, keepdims=True)
        e = jnp.exp(s - s_max)
        p = e * pl.reciprocal(jnp.sum(e, axis=-1, keepdims=True), approx=True)
        ctx = jnp.dot(p.astype(jnp.bfloat16), v_sc[hd],
                      preferred_element_type=jnp.float32)            # (tq, dh)
        ctx_sc[:, hd * dh:(hd + 1) * dh] = ctx.astype(jnp.bfloat16)

    # one K = H output projection instead of num_heads short-K matmuls
    attn = (jnp.dot(ctx_sc[...], wo_ref[...], preferred_element_type=jnp.float32)
            + bo_ref[...])
    return _layernorm(attn + h_tile, g_ref[...], be_ref[...])


def _ffn_ln(h, w1, b1, w2, b2, g, beta):
    """Intermediate dense + GELU + output dense + residual + LayerNorm."""
    # TODO(synk): HF RoBERTa uses exact (erf) GELU; tanh approximation used here.
    hb = h.astype(jnp.bfloat16)
    inter = jax.nn.gelu(
        jnp.dot(hb, w1, preferred_element_type=jnp.float32) + b1,
        approximate=True).astype(jnp.bfloat16)   # keep only one (tq, I) buffer live
    out = jnp.dot(inter, w2, preferred_element_type=jnp.float32) + b2
    return _layernorm(out + h, g, beta)


# --------------------------------- kernels -----------------------------------

def layernorm_kernel(x_ref, g_ref, b_ref, o_ref):
    o_ref[...] = _layernorm(x_ref[...], g_ref[...], b_ref[...])


def attention_kernel(h_ref, m_ref, wq_ref, bq_ref, wk_ref, bk_ref, wv_ref, bv_ref,
                     wo_ref, bo_ref, g_ref, be_ref, o_ref, k_sc, v_sc, ctx_sc,
                     *, num_heads, tq):
    o_ref[...] = _attention_tile(
        h_ref, m_ref, wq_ref, bq_ref, wk_ref, bk_ref, wv_ref, bv_ref,
        wo_ref, bo_ref, g_ref, be_ref, k_sc, v_sc, ctx_sc,
        num_heads=num_heads, tq=tq)


def ffn_kernel(h_ref, w1_ref, b1_ref, w2_ref, b2_ref, g_ref, beta_ref, o_ref):
    o_ref[...] = _ffn_ln(h_ref[...], w1_ref[...], b1_ref[...], w2_ref[...], b2_ref[...],
                         g_ref[...], beta_ref[...])


def encoder_layer_kernel(h_ref, m_ref, wq_ref, bq_ref, wk_ref, bk_ref, wv_ref, bv_ref,
                         wo_ref, bo_ref, g1_ref, be1_ref, w1_ref, bi1_ref, w2_ref,
                         bi2_ref, g2_ref, be2_ref, o_ref, k_sc, v_sc, ctx_sc,
                         *, num_heads, tq):
    """Fused encoder layer: attention+LN then FFN+LN, activation stays in VMEM."""
    a = _attention_tile(
        h_ref, m_ref, wq_ref, bq_ref, wk_ref, bk_ref, wv_ref, bv_ref,
        wo_ref, bo_ref, g1_ref, be1_ref, k_sc, v_sc, ctx_sc,
        num_heads=num_heads, tq=tq)
    o_ref[...] = _ffn_ln(a, w1_ref[...], bi1_ref[...], w2_ref[...], bi2_ref[...],
                         g2_ref[...], be2_ref[...])


def lowrank_mse_kernel(x_ref, wa_ref, ba_ref, wb_ref, bb_ref, o_ref, acc_ref, *, denom):
    """loss += sum(((x@Wa+ba)@Wb+bb - x)^2) over row tiles; mean written on last step."""
    @pl.when(pl.program_id(0) == 0)
    def _():
        acc_ref[...] = jnp.zeros_like(acc_ref)

    x = x_ref[...]
    xb = x.astype(jnp.bfloat16)
    mid = jnp.dot(xb, wa_ref[...], preferred_element_type=jnp.float32) + ba_ref[...]
    out = (jnp.dot(mid.astype(jnp.bfloat16), wb_ref[...],
                   preferred_element_type=jnp.float32) + bb_ref[...])
    d = out - x
    acc_ref[...] += jnp.reshape(jnp.sum(d * d), (1, 1))

    @pl.when(pl.program_id(0) == pl.num_programs(0) - 1)
    def _():
        # TODO(synk): scalar loss could be emitted via an SMEM output instead of a
        # padded (1,1) VMEM block (minor).
        o_ref[...] = acc_ref[...] * (1.0 / denom)


# ------------------------------ pallas wrappers -------------------------------

def _row_tile(rows, target):
    """Largest multiple-of-8 divisor of `rows` that is <= target (or full rows)."""
    if rows <= target:
        return rows
    t = min(target, rows)
    t -= t % 8
    while t >= 8:
        if rows % t == 0:
            return t
        t -= 8
    return rows


def layernorm(x2d, gamma, beta):
    R, H = x2d.shape
    tm = _row_tile(R, 512)
    return pl.pallas_call(
        layernorm_kernel,
        out_shape=jax.ShapeDtypeStruct((R, H), jnp.float32),
        grid=(R // tm,),
        in_specs=[pl.BlockSpec((tm, H), lambda i: (i, 0)),
                  _wspec((1, H)), _wspec((1, H))],
        out_specs=pl.BlockSpec((tm, H), lambda i: (i, 0)),
        compiler_params=pltpu.CompilerParams(
            dimension_semantics=("parallel",), vmem_limit_bytes=VMEM_LIMIT),
    )(x2d, gamma, beta)


def _attn_in_specs(S, H, num_heads):
    dh = H // num_heads
    full = lambda b, q: (b, 0, 0)    # constant across q tiles -> fetched once per batch
    return [
        pl.BlockSpec((None, S, H), full),      # full activation (for K/V + residual)
        pl.BlockSpec((None, 1, S), full),      # additive mask
        _wspec((num_heads, H, dh)), _wspec((num_heads, 1, dh)),   # Wq / bq per head
        _wspec((num_heads, H, dh)), _wspec((num_heads, 1, dh)),   # Wk / bk
        _wspec((num_heads, H, dh)), _wspec((num_heads, 1, dh)),   # Wv / bv
        _wspec((H, H)), _wspec((1, H)),                           # Wo / bo
        _wspec((1, H)), _wspec((1, H)),                           # LN1 gamma / beta
    ]


def _attn_scratch(S, H, num_heads, tq):
    dh = H // num_heads
    return [pltpu.VMEM((num_heads, S, dh), jnp.bfloat16),   # K (resident per batch row)
            pltpu.VMEM((num_heads, S, dh), jnp.bfloat16),   # V
            pltpu.VMEM((tq, H), jnp.bfloat16)]              # concatenated head contexts


def attention_block(h, add_mask, lp, num_heads, tq):
    B, S, H = h.shape
    kern = functools.partial(attention_kernel, num_heads=num_heads, tq=tq)
    return pl.pallas_call(
        kern,
        out_shape=jax.ShapeDtypeStruct((B, S, H), jnp.float32),
        grid=(B, S // tq),
        in_specs=_attn_in_specs(S, H, num_heads),
        out_specs=pl.BlockSpec((None, tq, H), lambda b, q: (b, q, 0)),
        scratch_shapes=_attn_scratch(S, H, num_heads, tq),
        compiler_params=pltpu.CompilerParams(
            dimension_semantics=("parallel", "arbitrary"),
            vmem_limit_bytes=VMEM_LIMIT),
    )(h, add_mask,
      lp["wq_h"], lp["bq_h"], lp["wk_h"], lp["bk_h"], lp["wv_h"], lp["bv_h"],
      lp["wo"], lp["bo"], lp["ln1_g"], lp["ln1_b"])


def ffn_block(h2d, lp):
    R, H = h2d.shape
    I = lp["w1"].shape[1]
    tm = _row_tile(R, 512)
    return pl.pallas_call(
        ffn_kernel,
        out_shape=jax.ShapeDtypeStruct((R, H), jnp.float32),
        grid=(R // tm,),
        in_specs=[pl.BlockSpec((tm, H), lambda i: (i, 0)),
                  _wspec((H, I)), _wspec((1, I)),
                  _wspec((I, H)), _wspec((1, H)),
                  _wspec((1, H)), _wspec((1, H))],
        out_specs=pl.BlockSpec((tm, H), lambda i: (i, 0)),
        compiler_params=pltpu.CompilerParams(
            dimension_semantics=("parallel",), vmem_limit_bytes=VMEM_LIMIT),
    )(h2d, lp["w1"], lp["b1"], lp["w2"], lp["b2"], lp["ln2_g"], lp["ln2_b"])


def encoder_layer(h, add_mask, lp, num_heads, tq):
    B, S, H = h.shape
    I = lp["w1"].shape[1]
    kern = functools.partial(encoder_layer_kernel, num_heads=num_heads, tq=tq)
    in_specs = _attn_in_specs(S, H, num_heads) + [
        _wspec((H, I)), _wspec((1, I)),
        _wspec((I, H)), _wspec((1, H)),
        _wspec((1, H)), _wspec((1, H)),
    ]
    return pl.pallas_call(
        kern,
        out_shape=jax.ShapeDtypeStruct((B, S, H), jnp.float32),
        grid=(B, S // tq),
        in_specs=in_specs,
        out_specs=pl.BlockSpec((None, tq, H), lambda b, q: (b, q, 0)),
        scratch_shapes=_attn_scratch(S, H, num_heads, tq),
        compiler_params=pltpu.CompilerParams(
            dimension_semantics=("parallel", "arbitrary"),
            vmem_limit_bytes=VMEM_LIMIT),
    )(h, add_mask,
      lp["wq_h"], lp["bq_h"], lp["wk_h"], lp["bk_h"], lp["wv_h"], lp["bv_h"],
      lp["wo"], lp["bo"], lp["ln1_g"], lp["ln1_b"],
      lp["w1"], lp["b1"], lp["w2"], lp["b2"], lp["ln2_g"], lp["ln2_b"])


def lowrank_mse(x2d, lin_a, lin_b):
    """MSE( linB(linA(x)), x ) fused in one accumulating kernel (no HBM intermediates)."""
    R, H = x2d.shape
    wa, ba = lin_a
    wb, bb = lin_b
    rank = wa.shape[1]
    tm = _row_tile(R, 512)
    kern = functools.partial(lowrank_mse_kernel, denom=float(R * H))
    out = pl.pallas_call(
        kern,
        out_shape=jax.ShapeDtypeStruct((1, 1), jnp.float32),
        grid=(R // tm,),
        in_specs=[pl.BlockSpec((tm, H), lambda i: (i, 0)),
                  _wspec((H, rank)), _wspec((1, rank)),
                  _wspec((rank, H)), _wspec((1, H))],
        out_specs=pl.BlockSpec((1, 1), lambda *_: (0, 0)),
        scratch_shapes=[pltpu.VMEM((1, 1), jnp.float32)],
        compiler_params=pltpu.CompilerParams(
            dimension_semantics=("arbitrary",), vmem_limit_bytes=VMEM_LIMIT),
    )(x2d, wa, ba, wb, bb)
    return out[0, 0]


# ------------------------------ parameter setup -------------------------------

def init_params(key, *, vocab, max_pos, hidden, heads, intermediate, n_layers, rank):
    keys = iter(jax.random.split(key, 1024))
    wdt = jnp.bfloat16  # MXU operand dtype (accumulation is f32 inside the kernels)
    dh = hidden // heads

    def nrm(shape, dtype=jnp.float32, scale=0.02):
        return (jax.random.normal(next(keys), shape, jnp.float32) * scale).astype(dtype)

    def per_head_w():
        # (H_in, H_out) -> (heads, H_in, dh): head hd owns output cols [hd*dh:(hd+1)*dh]
        w = nrm((hidden, hidden), jnp.float32)
        return jnp.transpose(w.reshape(hidden, heads, dh), (1, 0, 2)).astype(wdt)

    def per_head_b():
        return nrm((1, hidden), jnp.float32).reshape(heads, 1, dh)

    params = dict(
        hidden=hidden, heads=heads,
        word_emb=nrm((vocab, hidden)),
        pos_emb=nrm((max_pos, hidden)),
        type_emb=nrm((1, hidden)),
        emb_ln_g=jnp.ones((1, hidden), jnp.float32),
        emb_ln_b=jnp.zeros((1, hidden), jnp.float32),
        # args.compressdim == -1 branch: the low-rank linears act on the hidden dim
        lin1=(nrm((hidden, rank), wdt), nrm((1, rank))),
        lin2=(nrm((rank, hidden), wdt), nrm((1, hidden))),
        lin3=(nrm((hidden, rank), wdt), nrm((1, rank))),
        lin4=(nrm((rank, hidden), wdt), nrm((1, hidden))),
    )
    layers = []
    for _ in range(n_layers):
        layers.append(dict(
            wq_h=per_head_w(), bq_h=per_head_b(),
            wk_h=per_head_w(), bk_h=per_head_b(),
            wv_h=per_head_w(), bv_h=per_head_b(),
            wo=nrm((hidden, hidden), wdt), bo=nrm((1, hidden)),
            ln1_g=jnp.ones((1, hidden), jnp.float32),
            ln1_b=jnp.zeros((1, hidden), jnp.float32),
            w1=nrm((hidden, intermediate), wdt), b1=nrm((1, intermediate)),
            w2=nrm((intermediate, hidden), wdt), b2=nrm((1, hidden)),
            ln2_g=jnp.ones((1, hidden), jnp.float32),
            ln2_b=jnp.zeros((1, hidden), jnp.float32),
        ))
    params["layers"] = layers
    return params


# --------------------------------- forward ------------------------------------

def robertapretrain_forward(params, input_ids, mask):
    """Returns (loss1, loss2), matching Robertapretrain.forward semantics."""
    B, S = input_ids.shape
    H = params["hidden"]
    heads = params["heads"]
    tq = _row_tile(S, 128)   # query-row tile for the attention / fused-encoder grids

    # mask = reshape(B,1,1,S).float(); mask = (1 - mask) * -1e9
    # carried as (B,1,S); broadcasts over query rows inside the attention kernels.
    add_mask = (1.0 - mask.astype(jnp.float32)).reshape(B, 1, S) * -1.0e9

    # --- embeddings: gather is glue in plain JAX, LayerNorm tiled in Pallas ---
    # TODO(synk): dropout in embeddings/attention/FFN omitted (deterministic kernels).
    emb = (params["word_emb"][input_ids]
           + params["pos_emb"][:S][None, :, :]
           + params["type_emb"][0][None, None, :])
    emb = layernorm(emb.reshape(B * S, H),
                    params["emb_ln_g"], params["emb_ln_b"]).reshape(B, S, H)

    # --- part1 = EmbeddingAndAttention: embeddings + layer-0 attention block ---
    label1 = attention_block(emb, add_mask, params["layers"][0], heads, tq)

    # lin1 -> lin2 -> MSE against label1, fused (rank intermediate never hits HBM)
    loss1 = lowrank_mse(label1.reshape(B * S, H), params["lin1"], params["lin2"])

    # --- part2 = CombineLayer: layer-0 FFN, then fused encoder layers 1..N-1 ---
    # TODO(synk): cross-call weight prefetch (P10) for layers 1..N-1 not implemented.
    h = ffn_block(label1.reshape(B * S, H), params["layers"][0]).reshape(B, S, H)
    for lp in params["layers"][1:]:
        h = encoder_layer(h, add_mask, lp, heads, tq)
    label2 = h

    # lin3 -> lin4 -> MSE against label2, fused
    loss2 = lowrank_mse(label2.reshape(B * S, H), params["lin3"], params["lin4"])
    return loss1, loss2


# ----------------------------------- main --------------------------------------

if __name__ == "__main__":
    # Small but tile-aligned shapes: H multiple of 256 (fills a v6e/v7x MXU pass),
    # head dim = 64 (matches roberta-base), B*S rows a multiple of the row tiles so the
    # pipelined grids take multiple steps.
    B, S, H, heads, I, rank = 2, 256, 256, 4, 512, 64
    n_layers = 3          # layer 0 + 2 "remaining" roberta layers
    vocab, max_pos = 100, 256

    key = jax.random.PRNGKey(0)
    kp, ki = jax.random.split(key)
    params = init_params(kp, vocab=vocab, max_pos=max_pos, hidden=H, heads=heads,
                         intermediate=I, n_layers=n_layers, rank=rank)

    input_ids = jax.random.randint(ki, (B, S), 0, vocab, dtype=jnp.int32)
    mask = jnp.ones((B, S), jnp.float32).at[:, S - 16:].set(0.0)  # last tokens padded

    loss1, loss2 = robertapretrain_forward(params, input_ids, mask)
    jax.block_until_ready((loss1, loss2))
    assert bool(jnp.isfinite(loss1)) and bool(jnp.isfinite(loss2))
    print("KERNEL_OK")
</pallas_src>

<mosaic_0001>
module attributes {stable_mosaic.version = 11 : i64} {
  func.func @_k(%arg0: i32, %arg1: memref<8x128xf32, #tpu.memory_space<vmem>>, %arg2: memref<2x8x128xf32, #tpu.memory_space<vmem>>, %arg3: memref<8x128xf32, #tpu.memory_space<vmem>>) attributes {dimension_semantics = [#tpu.dimension_semantics<arbitrary>], iteration_bounds = array<i64: 2>, scalar_prefetch = 0 : i64, scratch_operands = 0 : i64, tpu.core_type = #tpu.core_type<tc>, window_params = [{pipeline_mode = #tpu.pipeline_mode<synchronous>, transform_indices = @transform_0, window_bounds = array<i64: 8, 128>}, {pipeline_mode = #tpu.pipeline_mode<synchronous>, transform_indices = @transform_1, window_bounds = array<i64: 2, 8, 128>}, {transform_indices = @transform_2, window_bounds = array<i64: 8, 128>}]} {
    %c0 = arith.constant 0 : index
    %c0_0 = arith.constant 0 : index
    %0 = vector.load %arg1[%c0, %c0_0] : memref<8x128xf32, #tpu.memory_space<vmem>>, vector<8x128xf32>
    %c0_1 = arith.constant 0 : index
    %c0_2 = arith.constant 0 : index
    %c0_3 = arith.constant 0 : index
    %1 = vector.load %arg2[%c0_1, %c0_2, %c0_3] : memref<2x8x128xf32, #tpu.memory_space<vmem>>, vector<1x8x128xf32>
    %2 = vector.shape_cast %1 : vector<1x8x128xf32> to vector<8x128xf32>
    %3 = arith.addf %0, %2 : vector<8x128xf32>
    %c0_4 = arith.constant 0 : index
    %c0_5 = arith.constant 0 : index
    %4 = vector.load %arg3[%c0_4, %c0_5] : memref<8x128xf32, #tpu.memory_space<vmem>>, vector<8x128xf32>
    tpu.vector_store %arg3[%c0_4, %c0_5], %3 {strides = array<i32>} : memref<8x128xf32, #tpu.memory_space<vmem>>, vector<8x128xf32>,
    return
  }
  func.func @transform_0(%arg0: i32) -> (i32, i32) {
    %c0_i32 = arith.constant 0 : i32
    %c0_i32_0 = arith.constant 0 : i32
    %c0_i32_1 = arith.constant 0 : i32
    return %c0_i32, %c0_i32_0 : i32, i32
  }
  func.func @transform_1(%arg0: i32) -> (i32, i32, i32) {
    %c0_i32 = arith.constant 0 : i32
    %c0_i32_0 = arith.constant 0 : i32
    %c0_i32_1 = arith.constant 0 : i32
    %c0_i32_2 = arith.constant 0 : i32
    return %c0_i32, %c0_i32_0, %c0_i32_1 : i32, i32, i32
  }
  func.func @transform_2(%arg0: i32) -> (i32, i32) {
    %c0_i32 = arith.constant 0 : i32
    %c0_i32_0 = arith.constant 0 : i32
    return %arg0, %c0_i32 : i32, i32
  }
}

module attributes {stable_mosaic.version = 11 : i64} {
  func.func @layernorm_kernel(%arg0: i32, %arg1: memref<512x256xf32, #tpu.memory_space<vmem>>, %arg2: memref<1x256xf32, #tpu.memory_space<vmem>>, %arg3: memref<1x256xf32, #tpu.memory_space<vmem>>, %arg4: memref<512x256xf32, #tpu.memory_space<vmem>>) attributes {dimension_semantics = [#tpu.dimension_semantics<parallel>], iteration_bounds = array<i64: 1>, scalar_prefetch = 0 : i64, scratch_operands = 0 : i64, tpu.core_type = #tpu.core_type<tc>, window_params = [{transform_indices = @transform_0, window_bounds = array<i64: 512, 256>}, {pipeline_mode = #tpu.pipeline_mode<synchronous>, transform_indices = @transform_1, window_bounds = array<i64: 1, 256>}, {pipeline_mode = #tpu.pipeline_mode<synchronous>, transform_indices = @transform_2, window_bounds = array<i64: 1, 256>}, {transform_indices = @transform_3, window_bounds = array<i64: 512, 256>}]} {
    %c0 = arith.constant 0 : index
    %c0_0 = arith.constant 0 : index
    %0 = vector.load %arg1[%c0, %c0_0] : memref<512x256xf32, #tpu.memory_space<vmem>>, vector<512x256xf32>
    %c0_1 = arith.constant 0 : index
    %c0_2 = arith.constant 0 : index
    %1 = vector.load %arg2[%c0_1, %c0_2] : memref<1x256xf32, #tpu.memory_space<vmem>>, vector<1x256xf32>
    %c0_3 = arith.constant 0 : index
    %c0_4 = arith.constant 0 : index
    %2 = vector.load %arg3[%c0_3, %c0_4] : memref<1x256xf32, #tpu.memory_space<vmem>>, vector<1x256xf32>
    %cst = arith.constant dense<0.000000e+00> : vector<512xf32>
    %3 = vector.multi_reduction <add>, %0, %cst [1] : vector<512x256xf32> to vector<512xf32>
    %4 = vector.shape_cast %3 : vector<512xf32> to vector<512x1xf32>
    %cst_5 = arith.constant 2.560000e+02 : f32
    %5 = vector.broadcast %cst_5 : f32 to vector<512x1xf32>
    %6 = arith.divf %4, %5 : vector<512x1xf32>
    %7 = arith.mulf %0, %0 : vector<512x256xf32>
    %cst_6 = arith.constant dense<0.000000e+00> : vector<512xf32>
    %8 = vector.multi_reduction <add>, %7, %cst_6 [1] : vector<512x256xf32> to vector<512xf32>
    %9 = vector.shape_cast %8 : vector<512xf32> to vector<512x1xf32>
    %cst_7 = arith.constant 2.560000e+02 : f32
    %10 = vector.broadcast %cst_7 : f32 to vector<512x1xf32>
    %11 = arith.divf %9, %10 : vector<512x1xf32>
    %12 = arith.mulf %6, %6 : vector<512x1xf32>
    %13 = arith.subf %11, %12 : vector<512x1xf32>
    %14 = vector.broadcast %6 : vector<512x1xf32> to vector<512x256xf32>
    %15 = arith.subf %0, %14 : vector<512x256xf32>
    %cst_8 = arith.constant 9.99999974E-6 : f32
    %16 = vector.broadcast %cst_8 : f32 to vector<512x1xf32>
    %17 = arith.addf %13, %16 : vector<512x1xf32>
    %18 = math.rsqrt %17 : vector<512x1xf32>
    %19 = vector.broadcast %18 : vector<512x1xf32> to vector<512x256xf32>
    %20 = arith.mulf %15, %19 : vector<512x256xf32>
    %21 = vector.broadcast %1 : vector<1x256xf32> to vector<512x256xf32>
    %22 = arith.mulf %20, %21 : vector<512x256xf32>
    %23 = vector.broadcast %2 : vector<1x256xf32> to vector<512x256xf32>
    %24 = arith.addf %22, %23 : vector<512x256xf32>
    %c0_9 = arith.constant 0 : index
    %c0_10 = arith.constant 0 : index
    %25 = vector.load %arg4[%c0_9, %c0_10] : memref<512x256xf32, #tpu.memory_space<vmem>>, vector<512x256xf32>
    tpu.vector_store %arg4[%c0_9, %c0_10], %24 {strides = array<i32>} : memref<512x256xf32, #tpu.memory_space<vmem>>, vector<512x256xf32>,
    return
  }
  func.func @transform_0(%arg0: i32) -> (i32, i32) {
    %c0_i32 = arith.constant 0 : i32
    %c0_i32_0 = arith.constant 0 : i32
    return %arg0, %c0_i32 : i32, i32
  }
  func.func @transform_1(%arg0: i32) -> (i32, i32) {
    %c0_i32 = arith.constant 0 : i32
    %c0_i32_0 = arith.constant 0 : i32
    %c0_i32_1 = arith.constant 0 : i32
    return %c0_i32, %c0_i32_0 : i32, i32
  }
  func.func @transform_2(%arg0: i32) -> (i32, i32) {
    %c0_i32 = arith.constant 0 : i32
    %c0_i32_0 = arith.constant 0 : i32
    %c0_i32_1 = arith.constant 0 : i32
    return %c0_i32, %c0_i32_0 : i32, i32
  }
  func.func @transform_3(%arg0: i32) -> (i32, i32) {
    %c0_i32 = arith.constant 0 : i32
    %c0_i32_0 = arith.constant 0 : i32
    return %arg0, %c0_i32 : i32, i32
  }
}

</mosaic_0001>

<llo_original>
// kernel: tpu_custom_call.1
$region0: #{tpu_custom_call.1}
  #allocation0 [shape = 'u32[]', space=smem, size = 0x4, offset = 0x4, fixed_abs, tag = 'smem constant byte address 0x4 - core index']
  #allocation1 [shape = 'u32[144,128]{1,0:T(1,128)}', space=vmem, size = 0x12000, scoped, tag = 'internal scratch']
  %s0 = inlined_call_operand.hbm [shape: f32[8,128], index: 0, kind: input, shape index: {}]
  %s1 = inlined_call_operand.hbm [shape: f32[2,8,128], index: 1, kind: input, shape index: {}]
  %s2 = inlined_call_operand.hbm [shape: f32[16,128], index: 2, kind: output, shape index: {}]
  %s3 = sld [smem:[#allocation0]]
  $region49: #{tpu_custom_call.1} parent=0
    _
  %s5 = ssub.s32 1, %s3
  %s6 = scalar_select 0, %s5, %s3
  $region1: #{tpu_custom_call.1} parent=0
    #allocation2 [shape = 'u8[4096]{0}', space=vmem, size = 0x1000, scoped, tag = 'input window, operand 0, single buffered']
    #allocation3 [shape = 's32[2]{0}', space=sflag, size = 0x8, scoped, tag = 'scoped memory for tpu_custom_call.1']
    #allocation4 [shape = 's32[2]{0}', space=sflag, size = 0x8, scoped, tag = 'scoped memory for tpu_custom_call.1']
    #allocation5 [shape = 'u8[8192]{0}', space=vmem, size = 0x2000, scoped, tag = 'input window, operand 1, single buffered']
    #allocation6 [shape = 's32[1]{0}', space=sflag, size = 0x4, scoped, tag = 'scoped memory for tpu_custom_call.1']
    #allocation7 [shape = 'u8[8192]{0}', space=vmem, size = 0x2000, scoped, tag = 'output window, operand 0']
    %7 = vsyncpa [#allocation3], 0
    %8 = vsyncpa [#allocation6], 0
    %9 = vsyncpa [#allocation4], 0
    %s10 = scalar_lea.sflag [#allocation4], 1
    %11 = vsyncpa %s10, 0
    loop: start=0, step=1, limit=4
    $region2: #{tpu_custom_call.1} parent=1 // loop_pre_header
      _
    $region3: #{tpu_custom_call.1} parent=1 // loop_header
      %s13 = sphi 0, %s17
      %p14 = scmp.ge.s32.totalorder %s13, 4
      %s21 = sphi 0, %s21
      %s23 = sphi 0, %s21
      %s24 = sphi 0, %s23
      %s38 = sphi 0, %s24
      %s42 = sphi 0, %s42
      %s44 = sphi 0, %s42
      %s45 = sphi 0, %s44
      %s59 = sphi 0, %s45
      %s65 = sphi 0, %s67
      %s68 = sphi 0, %s65
      %s69 = sphi 0, %s68
      %s85 = sphi 0, %s69
    $region4: #{tpu_custom_call.1} parent=1 // loop_header_branch
      %16 = sbr.rel (%p14) target = $region8
    $region5: #{tpu_custom_call.1} parent=1 // loop_body
      %s18 = ssub.s32 %s13, 1
      %s19 = ssub.s32 %s13, 2
      %s20 = sadd.s32 %s13, 1
      %s22 = sadd.s32 %s21, 1
      %p25 = scmp.eq.s32.totalorder %s13, 1
      %p26 = scmp.ne.s32.totalorder %s21, %s23
      %p27 = scmp.eq.s32.totalorder %s13, 0
      %p28 = por %p26, %p27
      %p29 = scmp.ne.s32.totalorder %s21, %s23
      %p30 = scmp.eq.s32.totalorder %s18, 1
      %p31 = por %p29, %p30
      %p32 = scmp.ne.s32.totalorder %s23, %s24
      %p33 = scmp.eq.s32.totalorder %s18, 0
      %p34 = por %p32, %p33
      %p35 = scmp.ne.s32.totalorder %s23, %s24
      %p36 = scmp.eq.s32.totalorder %s19, 1
      %p37 = por %p35, %p36
      %p39 = scmp.ne.s32.totalorder %s24, %s38
      %p40 = scmp.eq.s32.totalorder %s19, 0
      %p41 = por %p39, %p40
      %s43 = sadd.s32 %s42, 1
      %p46 = scmp.eq.s32.totalorder %s13, 1
      %p47 = scmp.ne.s32.totalorder %s42, %s44
      %p48 = scmp.eq.s32.totalorder %s13, 0
      %p49 = por %p47, %p48
      %p50 = scmp.ne.s32.totalorder %s42, %s44
      %p51 = scmp.eq.s32.totalorder %s18, 1
      %p52 = por %p50, %p51
      %p53 = scmp.ne.s32.totalorder %s44, %s45
      %p54 = scmp.eq.s32.totalorder %s18, 0
      %p55 = por %p53, %p54
      %p56 = scmp.ne.s32.totalorder %s44, %s45
      %p57 = scmp.eq.s32.totalorder %s19, 1
      %p58 = por %p56, %p57
      %p60 = scmp.ne.s32.totalorder %s45, %s59
      %p61 = scmp.eq.s32.totalorder %s19, 0
      %p62 = por %p60, %p61
      %s63 = ssub.s32 %s13, %s20
      %p64 = scmp.eq.s32.totalorder %s63, 0
      %s66 = sadd.s32 %s65, 1
      %s67 = scalar_select %p64, %s65, %s66
      %p70 = pneg %p64
      %p71 = scmp.eq.s32.totalorder %s13, 1
      %p72 = por %p70, %p71
      %p73 = scmp.ne.s32.totalorder %s65, %s68
      %p74 = scmp.eq.s32.totalorder %s13, 0
      %p75 = por %p73, %p74
      %p76 = scmp.ne.s32.totalorder %s65, %s68
      %p77 = scmp.eq.s32.totalorder %s18, 1
      %p78 = por %p76, %p77
      %p79 = scmp.ne.s32.totalorder %s68, %s69
      %p80 = scmp.eq.s32.totalorder %s18, 0
      %p81 = por %p79, %p80
      %p82 = scmp.ne.s32.totalorder %s68, %s69
      %p83 = scmp.eq.s32.totalorder %s19, 1
      %p84 = por %p82, %p83
      %p86 = scmp.ne.s32.totalorder %s69, %s85
      %p87 = scmp.eq.s32.totalorder %s19, 0
      %p88 = por %p86, %p87
      %p89 = scmp.le.s32.totalorder 1, %s13
      %p90 = scmp.lt.s32.totalorder %s13, 3
      %p91 = pnand %p89, %p90
      %p92 = pneg %p91
      // Predicated region
      $region9: #{tpu_custom_call.1} parent=5 // pred_check
        _
      $region10: #{tpu_custom_call.1} parent=5 // pred_check_branch
        %94 = sbr.rel (%p91) target = $region12
      $region11: #{tpu_custom_call.1} parent=5 // pred_region
        %s95 = ssub.s32 %s13, 1
        // Predicated region
        $region13: #{tpu_custom_call.1} parent=11 // pred_check
          %p96 = pneg %p34
        $region14: #{tpu_custom_call.1} parent=11 // pred_check_branch
          %98 = sbr.rel (%p96) target = $region16
        $region15: #{tpu_custom_call.1} parent=11 // pred_region
          %s100 = ssub.s32 128, 128
          %101 = vsyncadd [#allocation3], %s100
          %s103 = sshll.u32 [#allocation2], 4
          %s104 = int_to_ptr.vmem [resolvable:$true] %s103
          %106 = dma.hbm_to_vmem [thread:$0]  %s0, 128, %s104, [#allocation3]
        $region16: #{tpu_custom_call.1} parent=11 // pred_fallthru
          _
        // Predicated region
        $region17: #{tpu_custom_call.1} parent=11 // pred_check
          %p107 = pneg %p55
        $region18: #{tpu_custom_call.1} parent=11 // pred_check_branch
          %109 = sbr.rel (%p107) target = $region20
        $region19: #{tpu_custom_call.1} parent=11 // pred_region
          %s111 = ssub.s32 256, 256
          %112 = vsyncadd [#allocation6], %s111
          %s113 = sshll.u32 [#allocation5], 4
          %s114 = int_to_ptr.vmem [resolvable:$true] %s113
          %119 = dma.hbm_to_vmem [thread:$0]  %s1, 256, %s114, [#allocation6], 128, 128, 8
        $region20: #{tpu_custom_call.1} parent=11 // pred_fallthru
          _
      $region12: #{tpu_custom_call.1} parent=5 // pred_fallthru
        _
      %p120 = scmp.lt.s32.totalorder %s13, 2
      // Predicated region
      $region21: #{tpu_custom_call.1} parent=5 // pred_check
        %p121 = pneg %p120
      $region22: #{tpu_custom_call.1} parent=5 // pred_check_branch
        %123 = sbr.rel (%p121) target = $region24
      $region23: #{tpu_custom_call.1} parent=5 // pred_region
        _
      $region24: #{tpu_custom_call.1} parent=5 // pred_fallthru
        _
      %p124 = scmp.le.s32.totalorder 1, %s13
      %p125 = scmp.lt.s32.totalorder %s13, 3
      %p126 = pnand %p124, %p125
      %p127 = pneg %p126
      // Predicated region
      $region25: #{tpu_custom_call.1} parent=5 // pred_check
        _
      $region26: #{tpu_custom_call.1} parent=5 // pred_check_branch
        %129 = sbr.rel (%p126) target = $region28
      $region27: #{tpu_custom_call.1} parent=5 // pred_region
        %s130 = ssub.s32 %s13, 1
        // Predicated region
        $region29: #{tpu_custom_call.1} parent=27 // pred_check
          %p131 = pneg %p34
        $region30: #{tpu_custom_call.1} parent=27 // pred_check_branch
          %133 = sbr.rel (%p131) target = $region32
        $region31: #{tpu_custom_call.1} parent=27 // pred_region
          %134 = dma.done [#allocation3], 128
        $region32: #{tpu_custom_call.1} parent=27 // pred_fallthru
          _
        // Predicated region
        $region33: #{tpu_custom_call.1} parent=27 // pred_check
          %p135 = pneg %p55
        $region34: #{tpu_custom_call.1} parent=27 // pred_check_branch
          %137 = sbr.rel (%p135) target = $region36
        $region35: #{tpu_custom_call.1} parent=27 // pred_region
          %138 = dma.done [#allocation6], 256
        $region36: #{tpu_custom_call.1} parent=27 // pred_fallthru
          _
        %p139 = pneg %p34
        %p140 = pneg %p31
        %p141 = pneg %p55
        %p142 = pneg %p52
        %p143 = pneg %p81
        %p144 = pneg %p78
        %s145 = sand.u32 %s68, 1
        %s146 = scalar_lea.sflag [#allocation4], %s145
        %s147 = sand.u32 %s68, 1
        %s148 = smul.addr %s147, 8
        %s149 = scalar_lea.vmem [#allocation7], %s148
        %v150 = vld [vmem:[#allocation2] sm:$0xff]
        %v151 = vld [vmem:[#allocation5] sm:$0xff]
        %v152 = vadd.f32 %v150, %v151
        %153 = vst [vmem:[%s149] sm:$0xff] %v152
        %s154 = sand.u32 %s68, 1
        %s155 = scalar_lea.sflag [#allocation4], %s154
        %s156 = sand.u32 %s68, 1
        %s157 = smul.addr %s156, 8
        %s158 = scalar_lea.vmem [#allocation7], %s157
        // Predicated region
        $region37: #{tpu_custom_call.1} parent=27 // pred_check
          %p159 = pneg %p78
        $region38: #{tpu_custom_call.1} parent=27 // pred_check_branch
          %161 = sbr.rel (%p159) target = $region40
        $region39: #{tpu_custom_call.1} parent=27 // pred_region
          %s163 = ssub.s32 128, 128
          %164 = vsyncadd %s155, %s163
          %s165 = smul.addr %s18, 128
          %s166 = scalar_lea.hbm %s2, %s165
          %s168 = sshll.u32 %s158, 4
          %s169 = int_to_ptr.vmem [resolvable:$true] %s168
          %171 = dma.vmem_to_hbm [thread:$0]  %s169, 128, %s166, %s155
        $region40: #{tpu_custom_call.1} parent=27 // pred_fallthru
          _
      $region28: #{tpu_custom_call.1} parent=5 // pred_fallthru
        _
      %p172 = scmp.le.s32.totalorder 2, %s13
      // Predicated region
      $region41: #{tpu_custom_call.1} parent=5 // pred_check
        %p173 = pneg %p172
      $region42: #{tpu_custom_call.1} parent=5 // pred_check_branch
        %175 = sbr.rel (%p173) target = $region44
      $region43: #{tpu_custom_call.1} parent=5 // pred_region
        %s176 = ssub.s32 %s13, 2
        // Predicated region
        $region45: #{tpu_custom_call.1} parent=43 // pred_check
          %p177 = pneg %p84
        $region46: #{tpu_custom_call.1} parent=43 // pred_check_branch
          %179 = sbr.rel (%p177) target = $region48
        $region47: #{tpu_custom_call.1} parent=43 // pred_region
          %s180 = sand.u32 %s69, 1
          %s181 = scalar_lea.sflag [#allocation4], %s180
          %s182 = sand.u32 %s69, 1
          %s183 = smul.addr %s182, 8
          %s184 = scalar_lea.vmem [#allocation7], %s183
          %185 = dma.done %s181, 128
        $region48: #{tpu_custom_call.1} parent=43 // pred_fallthru
          _
      $region44: #{tpu_custom_call.1} parent=5 // pred_fallthru
        _
    $region6: #{tpu_custom_call.1} parent=1 // loop_footer
      %s17 = sadd.s32 1, %s13
    $region7: #{tpu_custom_call.1} parent=1 // loop_footer_branch
      %12 = sbr.rel target = $region3
    $region8: #{tpu_custom_call.1} parent=1 // loop_exit
      _
    %186 = vsyncpa [#allocation3], 1
    %s187 = scalar_lea.sflag [#allocation3], 1
    %188 = vsyncpa %s187, 1
    %189 = vsyncpa [#allocation6], 1
    %190 = vsyncpa [#allocation4], 1
    %s191 = scalar_lea.sflag [#allocation4], 1
    %192 = vsyncpa %s191, 1

// kernel: tpu_custom_call.1
$region0: #{tpu_custom_call.1}
  #allocation0 [shape = 'u32[]', space=smem, size = 0x4, offset = 0x4, fixed_abs, tag = 'smem constant byte address 0x4 - core index']
  #allocation1 [shape = 'u32[144,128]{1,0:T(1,128)}', space=vmem, size = 0x12000, scoped, tag = 'internal scratch']
  %s0 = inlined_call_operand.hbm [shape: f32[512,256], index: 0, kind: input, shape index: {}]
  %s1 = inlined_call_operand.vmem [shape: f32[1,256], index: 1, kind: input, shape index: {}]
  %s2 = inlined_call_operand.vmem [shape: f32[1,256], index: 2, kind: input, shape index: {}]
  %s3 = inlined_call_operand.hbm [shape: f32[512,256], index: 3, kind: output, shape index: {}]
  %s4 = sld [smem:[#allocation0]]
  $region26: #{tpu_custom_call.1} parent=0
    _
  %s6 = ssub.s32 1, %s4
  %s7 = scalar_select 0, %s6, %s4
  $region1: #{tpu_custom_call.1} parent=0
    #allocation2 [shape = 'u8[524288]{0}', space=vmem, size = 0x80000, scoped, tag = 'input window, operand 0, single buffered']
    #allocation3 [shape = 's32[1]{0}', space=sflag, size = 0x4, scoped, tag = 'scoped memory for tpu_custom_call.1']
    #allocation4 [shape = 's32[1]{0}', space=sflag, size = 0x4, scoped, tag = 'scoped memory for tpu_custom_call.1']
    #allocation5 [shape = 'u8[524288]{0}', space=vmem, size = 0x80000, scoped, tag = 'output window, operand 0, single buffered']
    %8 = vsyncpa [#allocation3], 0
    %9 = vsyncpa [#allocation4], 0
    // Predicated region
    $region2: #{tpu_custom_call.1} parent=1 // pred_check
      _
    $region3: #{tpu_custom_call.1} parent=1 // pred_check_branch
      %11 = sbr.rel (0) target = $region5
    $region4: #{tpu_custom_call.1} parent=1 // pred_region
      %s13 = ssub.s32 16384, 16384
      %14 = vsyncadd [#allocation3], %s13
      %s15 = sshll.u32 [#allocation2], 4
      %s16 = int_to_ptr.vmem [resolvable:$true] %s15
      %21 = dma.hbm_to_vmem [thread:$0]  %s0, 16384, %s16, [#allocation3], 256, 256, 16
    $region5: #{tpu_custom_call.1} parent=1 // pred_fallthru
      _
    // Predicated region
    $region6: #{tpu_custom_call.1} parent=1 // pred_check
      _
    $region7: #{tpu_custom_call.1} parent=1 // pred_check_branch
      %23 = sbr.rel (0) target = $region9
    $region8: #{tpu_custom_call.1} parent=1 // pred_region
      _
    $region9: #{tpu_custom_call.1} parent=1 // pred_fallthru
      _
    // Predicated region
    $region10: #{tpu_custom_call.1} parent=1 // pred_check
      _
    $region11: #{tpu_custom_call.1} parent=1 // pred_check_branch
      %25 = sbr.rel (0) target = $region13
    $region12: #{tpu_custom_call.1} parent=1 // pred_region
      _
    $region13: #{tpu_custom_call.1} parent=1 // pred_fallthru
      _
    // Predicated region
    $region14: #{tpu_custom_call.1} parent=1 // pred_check
      _
    $region15: #{tpu_custom_call.1} parent=1 // pred_check_branch
      %27 = sbr.rel (0) target = $region17
    $region16: #{tpu_custom_call.1} parent=1 // pred_region
      %28 = dma.done [#allocation3], 16384
    $region17: #{tpu_custom_call.1} parent=1 // pred_fallthru
      _
    %v29 = vld [vmem:[#allocation2] sm:$0xff]
    %v30 = vld [vmem:[#allocation2 + $0x8] sm:$0xff]
    %v31 = vld [vmem:[#allocation2 + $0x10] sm:$0xff]
    %v32 = vld [vmem:[#allocation2 + $0x18] sm:$0xff]
    %v33 = vld [vmem:[#allocation2 + $0x20] sm:$0xff]
    %v34 = vld [vmem:[#allocation2 + $0x28] sm:$0xff]
    %v35 = vld [vmem:[#allocation2 + $0x30] sm:$0xff]
    %v36 = vld [vmem:[#allocation2 + $0x38] sm:$0xff]
    %v37 = vld [vmem:[#allocation2 + $0x40] sm:$0xff]
    %v38 = vld [vmem:[#allocation2 + $0x48] sm:$0xff]
    %v39 = vld [vmem:[#allocation2 + $0x50] sm:$0xff]
    %v40 = vld [vmem:[#allocation2 + $0x58] sm:$0xff]
    %v41 = vld [vmem:[#allocation2 + $0x60] sm:$0xff]
    %v42 = vld [vmem:[#allocation2 + $0x68] sm:$0xff]
    %v43 = vld [vmem:[#allocation2 + $0x70] sm:$0xff]
    %v44 = vld [vmem:[#allocation2 + $0x78] sm:$0xff]
    %v45 = vld [vmem:[#allocation2 + $0x80] sm:$0xff]
    %v46 = vld [vmem:[#allocation2 + $0x88] sm:$0xff]
    %v47 = vld [vmem:[#allocation2 + $0x90] sm:$0xff]
    %v48 = vld [vmem:[#allocation2 + $0x98] sm:$0xff]
    %v49 = vld [vmem:[#allocation2 + $0xa0] sm:$0xff]
    %v50 = vld [vmem:[#allocation2 + $0xa8] sm:$0xff]
    %v51 = vld [vmem:[#allocation2 + $0xb0] sm:$0xff]
    %v52 = vld [vmem:[#allocation2 + $0xb8] sm:$0xff]
    %v53 = vld [vmem:[#allocation2 + $0xc0] sm:$0xff]
    %v54 = vld [vmem:[#allocation2 + $0xc8] sm:$0xff]
    %v55 = vld [vmem:[#allocation2 + $0xd0] sm:$0xff]
    %v56 = vld [vmem:[#allocation2 + $0xd8] sm:$0xff]
    %v57 = vld [vmem:[#allocation2 + $0xe0] sm:$0xff]
    %v58 = vld [vmem:[#allocation2 + $0xe8] sm:$0xff]
    %v59 = vld [vmem:[#allocation2 + $0xf0] sm:$0xff]
    %v60 = vld [vmem:[#allocation2 + $0xf8] sm:$0xff]
    %v61 = vld [vmem:[#allocation2 + $0x100] sm:$0xff]
    %v62 = vld [vmem:[#allocation2 + $0x108] sm:$0xff]
    %v63 = vld [vmem:[#allocation2 + $0x110] sm:$0xff]
    %v64 = vld [vmem:[#allocation2 + $0x118] sm:$0xff]
    %v65 = vld [vmem:[#allocation2 + $0x120] sm:$0xff]
    %v66 = vld [vmem:[#allocation2 + $0x128] sm:$0xff]
    %v67 = vld [vmem:[#allocation2 + $0x130] sm:$0xff]
    %v68 = vld [vmem:[#allocation2 + $0x138] sm:$0xff]
    %v69 = vld [vmem:[#allocation2 + $0x140] sm:$0xff]
    %v70 = vld [vmem:[#allocation2 + $0x148] sm:$0xff]
    %v71 = vld [vmem:[#allocation2 + $0x150] sm:$0xff]
    %v72 = vld [vmem:[#allocation2 + $0x158] sm:$0xff]
    %v73 = vld [vmem:[#allocation2 + $0x160] sm:$0xff]
    %v74 = vld [vmem:[#allocation2 + $0x168] sm:$0xff]
    %v75 = vld [vmem:[#allocation2 + $0x170] sm:$0xff]
    %v76 = vld [vmem:[#allocation2 + $0x178] sm:$0xff]
    %v77 = vld [vmem:[#allocation2 + $0x180] sm:$0xff]
    %v78 = vld [vmem:[#allocation2 + $0x188] sm:$0xff]
    %v79 = vld [vmem:[#allocation2 + $0x190] sm:$0xff]
    %v80 = vld [vmem:[#allocation2 + $0x198] sm:$0xff]
    %v81 = vld [vmem:[#allocation2 + $0x1a0] sm:$0xff]
    %v82 = vld [vmem:[#allocation2 + $0x1a8] sm:$0xff]
    %v83 = vld [vmem:[#allocation2 + $0x1b0] sm:$0xff]
    %v84 = vld [vmem:[#allocation2 + $0x1b8] sm:$0xff]
    %v85 = vld [vmem:[#allocation2 + $0x1c0] sm:$0xff]
    %v86 = vld [vmem:[#allocation2 + $0x1c8] sm:$0xff]
    %v87 = vld [vmem:[#allocation2 + $0x1d0] sm:$0xff]
    %v88 = vld [vmem:[#allocation2 + $0x1d8] sm:$0xff]
    %v89 = vld [vmem:[#allocation2 + $0x1e0] sm:$0xff]
    %v90 = vld [vmem:[#allocation2 + $0x1e8] sm:$0xff]
    %v91 = vld [vmem:[#allocation2 + $0x1f0] sm:$0xff]
    %v92 = vld [vmem:[#allocation2 + $0x1f8] sm:$0xff]
    %v93 = vld [vmem:[#allocation2 + $0x200] sm:$0xff]
    %v94 = vld [vmem:[#allocation2 + $0x208] sm:$0xff]
    %v95 = vld [vmem:[#allocation2 + $0x210] sm:$0xff]
    %v96 = vld [vmem:[#allocation2 + $0x218] sm:$0xff]
    %v97 = vld [vmem:[#allocation2 + $0x220] sm:$0xff]
    %v98 = vld [vmem:[#allocation2 + $0x228] sm:$0xff]
    %v99 = vld [vmem:[#allocation2 + $0x230] sm:$0xff]
    %v100 = vld [vmem:[#allocation2 + $0x238] sm:$0xff]
    %v101 = vld [vmem:[#allocation2 + $0x240] sm:$0xff]
    %v102 = vld [vmem:[#allocation2 + $0x248] sm:$0xff]
    %v103 = vld [vmem:[#allocation2 + $0x250] sm:$0xff]
    %v104 = vld [vmem:[#allocation2 + $0x258] sm:$0xff]
    %v105 = vld [vmem:[#allocation2 + $0x260] sm:$0xff]
    %v106 = vld [vmem:[#allocation2 + $0x268] sm:$0xff]
    %v107 = vld [vmem:[#allocation2 + $0x270] sm:$0xff]
    %v108 = vld [vmem:[#allocation2 + $0x278] sm:$0xff]
    %v109 = vld [vmem:[#allocation2 + $0x280] sm:$0xff]
    %v110 = vld [vmem:[#allocation2 + $0x288] sm:$0xff]
    %v111 = vld [vmem:[#allocation2 + $0x290] sm:$0xff]
    %v112 = vld [vmem:[#allocation2 + $0x298] sm:$0xff]
    %v113 = vld [vmem:[#allocation2 + $0x2a0] sm:$0xff]
    %v114 = vld [vmem:[#allocation2 + $0x2a8] sm:$0xff]
    %v115 = vld [vmem:[#allocation2 + $0x2b0] sm:$0xff]
    %v116 = vld [vmem:[#allocation2 + $0x2b8] sm:$0xff]
    %v117 = vld [vmem:[#allocation2 + $0x2c0] sm:$0xff]
    %v118 = vld [vmem:[#allocation2 + $0x2c8] sm:$0xff]
    %v119 = vld [vmem:[#allocation2 + $0x2d0] sm:$0xff]
    %v120 = vld [vmem:[#allocation2 + $0x2d8] sm:$0xff]
    %v121 = vld [vmem:[#allocation2 + $0x2e0] sm:$0xff]
    %v122 = vld [vmem:[#allocation2 + $0x2e8] sm:$0xff]
    %v123 = vld [vmem:[#allocation2 + $0x2f0] sm:$0xff]
    %v124 = vld [vmem:[#allocation2 + $0x2f8] sm:$0xff]
    %v125 = vld [vmem:[#allocation2 + $0x300] sm:$0xff]
    %v126 = vld [vmem:[#allocation2 + $0x308] sm:$0xff]
    %v127 = vld [vmem:[#allocation2 + $0x310] sm:$0xff]
    %v128 = vld [vmem:[#allocation2 + $0x318] sm:$0xff]
    %v129 = vld [vmem:[#allocation2 + $0x320] sm:$0xff]
    %v130 = vld [vmem:[#allocation2 + $0x328] sm:$0xff]
    %v131 = vld [vmem:[#allocation2 + $0x330] sm:$0xff]
    %v132 = vld [vmem:[#allocation2 + $0x338] sm:$0xff]
    %v133 = vld [vmem:[#allocation2 + $0x340] sm:$0xff]
    %v134 = vld [vmem:[#allocation2 + $0x348] sm:$0xff]
    %v135 = vld [vmem:[#allocation2 + $0x350] sm:$0xff]
    %v136 = vld [vmem:[#allocation2 + $0x358] sm:$0xff]
    %v137 = vld [vmem:[#allocation2 + $0x360] sm:$0xff]
    %v138 = vld [vmem:[#allocation2 + $0x368] sm:$0xff]
    %v139 = vld [vmem:[#allocation2 + $0x370] sm:$0xff]
    %v140 = vld [vmem:[#allocation2 + $0x378] sm:$0xff]
    %v141 = vld [vmem:[#allocation2 + $0x380] sm:$0xff]
    %v142 = vld [vmem:[#allocation2 + $0x388] sm:$0xff]
    %v143 = vld [vmem:[#allocation2 + $0x390] sm:$0xff]
    %v144 = vld [vmem:[#allocation2 + $0x398] sm:$0xff]
    %v145 = vld [vmem:[#allocation2 + $0x3a0] sm:$0xff]
    %v146 = vld [vmem:[#allocation2 + $0x3a8] sm:$0xff]
    %v147 = vld [vmem:[#allocation2 + $0x3b0] sm:$0xff]
    %v148 = vld [vmem:[#allocation2 + $0x3b8] sm:$0xff]
    %v149 = vld [vmem:[#allocation2 + $0x3c0] sm:$0xff]
    %v150 = vld [vmem:[#allocation2 + $0x3c8] sm:$0xff]
    %v151 = vld [vmem:[#allocation2 + $0x3d0] sm:$0xff]
    %v152 = vld [vmem:[#allocation2 + $0x3d8] sm:$0xff]
    %v153 = vld [vmem:[#allocation2 + $0x3e0] sm:$0xff]
    %v154 = vld [vmem:[#allocation2 + $0x3e8] sm:$0xff]
    %v155 = vld [vmem:[#allocation2 + $0x3f0] sm:$0xff]
    %v156 = vld [vmem:[#allocation2 + $0x3f8] sm:$0xff]
    %v157 = vld [vmem:[%s1] sm:$0x3]
    %v158 = vld [vmem:[%s2] sm:$0x3]
    %v159 = vadd.f32 %v29, %v30
    %160 = vadd.xlane.f32.xlu0 %v159
    %v161 = vpop.xlane.xlu0 %160
    %v162 = vadd.f32 %v31, %v32
    %163 = vadd.xlane.f32.xlu0 %v162
    %v164 = vpop.xlane.xlu0 %163
    %v165 = vadd.f32 %v33, %v34
    %166 = vadd.xlane.f32.xlu0 %v165
    %v167 = vpop.xlane.xlu0 %166
    %v168 = vadd.f32 %v35, %v36
    %169 = vadd.xlane.f32.xlu0 %v168
    %v170 = vpop.xlane.xlu0 %169
    %v171 = vadd.f32 %v37, %v38
    %172 = vadd.xlane.f32.xlu0 %v171
    %v173 = vpop.xlane.xlu0 %172
    %v174 = vadd.f32 %v39, %v40
    %175 = vadd.xlane.f32.xlu0 %v174
    %v176 = vpop.xlane.xlu0 %175
    %v177 = vadd.f32 %v41, %v42
    %178 = vadd.xlane.f32.xlu0 %v177
    %v179 = vpop.xlane.xlu0 %178
    %v180 = vadd.f32 %v43, %v44
    %181 = vadd.xlane.f32.xlu0 %v180
    %v182 = vpop.xlane.xlu0 %181
    %v183 = vadd.f32 %v45, %v46
    %184 = vadd.xlane.f32.xlu0 %v183
    %v185 = vpop.xlane.xlu0 %184
    %v186 = vadd.f32 %v47, %v48
    %187 = vadd.xlane.f32.xlu0 %v186
    %v188 = vpop.xlane.xlu0 %187
    %v189 = vadd.f32 %v49, %v50
    %190 = vadd.xlane.f32.xlu0 %v189
    %v191 = vpop.xlane.xlu0 %190
    %v192 = vadd.f32 %v51, %v52
    %193 = vadd.xlane.f32.xlu0 %v192
    %v194 = vpop.xlane.xlu0 %193
    %v195 = vadd.f32 %v53, %v54
    %196 = vadd.xlane.f32.xlu0 %v195
    %v197 = vpop.xlane.xlu0 %196
    %v198 = vadd.f32 %v55, %v56
    %199 = vadd.xlane.f32.xlu0 %v198
    %v200 = vpop.xlane.xlu0 %199
    %v201 = vadd.f32 %v57, %v58
    %202 = vadd.xlane.f32.xlu0 %v201
    %v203 = vpop.xlane.xlu0 %202
    %v204 = vadd.f32 %v59, %v60
    %205 = vadd.xlane.f32.xlu0 %v204
    %v206 = vpop.xlane.xlu0 %205
    %v207 = vadd.f32 %v61, %v62
    %208 = vadd.xlane.f32.xlu0 %v207
    %v209 = vpop.xlane.xlu0 %208
    %v210 = vadd.f32 %v63, %v64
    %211 = vadd.xlane.f32.xlu0 %v210
    %v212 = vpop.xlane.xlu0 %211
    %v213 = vadd.f32 %v65, %v66
    %214 = vadd.xlane.f32.xlu0 %v213
    %v215 = vpop.xlane.xlu0 %214
    %v216 = vadd.f32 %v67, %v68
    %217 = vadd.xlane.f32.xlu0 %v216
    %v218 = vpop.xlane.xlu0 %217
    %v219 = vadd.f32 %v69, %v70
    %220 = vadd.xlane.f32.xlu0 %v219
    %v221 = vpop.xlane.xlu0 %220
    %v222 = vadd.f32 %v71, %v72
    %223 = vadd.xlane.f32.xlu0 %v222
    %v224 = vpop.xlane.xlu0 %223
    %v225 = vadd.f32 %v73, %v74
    %226 = vadd.xlane.f32.xlu0 %v225
    %v227 = vpop.xlane.xlu0 %226
    %v228 = vadd.f32 %v75, %v76
    %229 = vadd.xlane.f32.xlu0 %v228
    %v230 = vpop.xlane.xlu0 %229
    %v231 = vadd.f32 %v77, %v78
    %232 = vadd.xlane.f32.xlu0 %v231
    %v233 = vpop.xlane.xlu0 %232
    %v234 = vadd.f32 %v79, %v80
    %235 = vadd.xlane.f32.xlu0 %v234
    %v236 = vpop.xlane.xlu0 %235
    %v237 = vadd.f32 %v81, %v82
    %238 = vadd.xlane.f32.xlu0 %v237
    %v239 = vpop.xlane.xlu0 %238
    %v240 = vadd.f32 %v83, %v84
    %241 = vadd.xlane.f32.xlu0 %v240
    %v242 = vpop.xlane.xlu0 %241
    %v243 = vadd.f32 %v85, %v86
    %244 = vadd.xlane.f32.xlu0 %v243
    %v245 = vpop.xlane.xlu0 %244
    %v246 = vadd.f32 %v87, %v88
    %247 = vadd.xlane.f32.xlu0 %v246
    %v248 = vpop.xlane.xlu0 %247
    %v249 = vadd.f32 %v89, %v90
    %250 = vadd.xlane.f32.xlu0 %v249
    %v251 = vpop.xlane.xlu0 %250
    %v252 = vadd.f32 %v91, %v92
    %253 = vadd.xlane.f32.xlu0 %v252
    %v254 = vpop.xlane.xlu0 %253
    %v255 = vadd.f32 %v93, %v94
    %256 = vadd.xlane.f32.xlu0 %v255
    %v257 = vpop.xlane.xlu0 %256
    %v258 = vadd.f32 %v95, %v96
    %259 = vadd.xlane.f32.xlu0 %v258
    %v260 = vpop.xlane.xlu0 %259
    %v261 = vadd.f32 %v97, %v98
    %262 = vadd.xlane.f32.xlu0 %v261
    %v263 = vpop.xlane.xlu0 %262
    %v264 = vadd.f32 %v99, %v100
    %265 = vadd.xlane.f32.xlu0 %v264
    %v266 = vpop.xlane.xlu0 %265
    %v267 = vadd.f32 %v101, %v102
    %268 = vadd.xlane.f32.xlu0 %v267
    %v269 = vpop.xlane.xlu0 %268
    %v270 = vadd.f32 %v103, %v104
    %271 = vadd.xlane.f32.xlu0 %v270
    %v272 = vpop.xlane.xlu0 %271
    %v273 = vadd.f32 %v105, %v106
    %274 = vadd.xlane.f32.xlu0 %v273
    %v275 = vpop.xlane.xlu0 %274
    %v276 = vadd.f32 %v107, %v108
    %277 = vadd.xlane.f32.xlu0 %v276
    %v278 = vpop.xlane.xlu0 %277
    %v279 = vadd.f32 %v109, %v110
    %280 = vadd.xlane.f32.xlu0 %v279
    %v281 = vpop.xlane.xlu0 %280
    %v282 = vadd.f32 %v111, %v112
    %283 = vadd.xlane.f32.xlu0 %v282
    %v284 = vpop.xlane.xlu0 %283
    %v285 = vadd.f32 %v113, %v114
    %286 = vadd.xlane.f32.xlu0 %v285
    %v287 = vpop.xlane.xlu0 %286
    %v288 = vadd.f32 %v115, %v116
    %289 = vadd.xlane.f32.xlu0 %v288
    %v290 = vpop.xlane.xlu0 %289
    %v291 = vadd.f32 %v117, %v118
    %292 = vadd.xlane.f32.xlu0 %v291
    %v293 = vpop.xlane.xlu0 %292
    %v294 = vadd.f32 %v119, %v120
    %295 = vadd.xlane.f32.xlu0 %v294
    %v296 = vpop.xlane.xlu0 %295
    %v297 = vadd.f32 %v121, %v122
    %298 = vadd.xlane.f32.xlu0 %v297
    %v299 = vpop.xlane.xlu0 %298
    %v300 = vadd.f32 %v123, %v124
    %301 = vadd.xlane.f32.xlu0 %v300
    %v302 = vpop.xlane.xlu0 %301
    %v303 = vadd.f32 %v125, %v126
    %304 = vadd.xlane.f32.xlu0 %v303
    %v305 = vpop.xlane.xlu0 %304
    %v306 = vadd.f32 %v127, %v128
    %307 = vadd.xlane.f32.xlu0 %v306
    %v308 = vpop.xlane.xlu0 %307
    %v309 = vadd.f32 %v129, %v130
    %310 = vadd.xlane.f32.xlu0 %v309
    %v311 = vpop.xlane.xlu0 %310
    %v312 = vadd.f32 %v131, %v132
    %313 = vadd.xlane.f32.xlu0 %v312
    %v314 = vpop.xlane.xlu0 %313
    %v315 = vadd.f32 %v133, %v134
    %316 = vadd.xlane.f32.xlu0 %v315
    %v317 = vpop.xlane.xlu0 %316
    %v318 = vadd.f32 %v135, %v136
    %319 = vadd.xlane.f32.xlu0 %v318
    %v320 = vpop.xlane.xlu0 %319
    %v321 = vadd.f32 %v137, %v138
    %322 = vadd.xlane.f32.xlu0 %v321
    %v323 = vpop.xlane.xlu0 %322
    %v324 = vadd.f32 %v139, %v140
    %325 = vadd.xlane.f32.xlu0 %v324
    %v326 = vpop.xlane.xlu0 %325
    %v327 = vadd.f32 %v141, %v142
    %328 = vadd.xlane.f32.xlu0 %v327
    %v329 = vpop.xlane.xlu0 %328
    %v330 = vadd.f32 %v143, %v144
    %331 = vadd.xlane.f32.xlu0 %v330
    %v332 = vpop.xlane.xlu0 %331
    %v333 = vadd.f32 %v145, %v146
    %334 = vadd.xlane.f32.xlu0 %v333
    %v335 = vpop.xlane.xlu0 %334
    %v336 = vadd.f32 %v147, %v148
    %337 = vadd.xlane.f32.xlu0 %v336
    %v338 = vpop.xlane.xlu0 %337
    %v339 = vadd.f32 %v149, %v150
    %340 = vadd.xlane.f32.xlu0 %v339
    %v341 = vpop.xlane.xlu0 %340
    %v342 = vadd.f32 %v151, %v152
    %343 = vadd.xlane.f32.xlu0 %v342
    %v344 = vpop.xlane.xlu0 %343
    %v345 = vadd.f32 %v153, %v154
    %346 = vadd.xlane.f32.xlu0 %v345
    %v347 = vpop.xlane.xlu0 %346
    %v348 = vadd.f32 %v155, %v156
    %349 = vadd.xlane.f32.xlu0 %v348
    %v350 = vpop.xlane.xlu0 %349
    %v351 = vrcp.pop 256.0
    %v352 = vmul.f32 %v161, %v351
    %v353 = vmul.f32 %v164, %v351
    %v354 = vmul.f32 %v167, %v351
    %v355 = vmul.f32 %v170, %v351
    %v356 = vmul.f32 %v173, %v351
    %v357 = vmul.f32 %v176, %v351
    %v358 = vmul.f32 %v179, %v351
    %v359 = vmul.f32 %v182, %v351
    %v360 = vmul.f32 %v185, %v351
    %v361 = vmul.f32 %v188, %v351
    %v362 = vmul.f32 %v191, %v351
    %v363 = vmul.f32 %v194, %v351
    %v364 = vmul.f32 %v197, %v351
    %v365 = vmul.f32 %v200, %v351
    %v366 = vmul.f32 %v203, %v351
    %v367 = vmul.f32 %v206, %v351
    %v368 = vmul.f32 %v209, %v351
    %v369 = vmul.f32 %v212, %v351
    %v370 = vmul.f32 %v215, %v351
    %v371 = vmul.f32 %v218, %v351
    %v372 = vmul.f32 %v221, %v351
    %v373 = vmul.f32 %v224, %v351
    %v374 = vmul.f32 %v227, %v351
    %v375 = vmul.f32 %v230, %v351
    %v376 = vmul.f32 %v233, %v351
    %v377 = vmul.f32 %v236, %v351
    %v378 = vmul.f32 %v239, %v351
    %v379 = vmul.f32 %v242, %v351
    %v380 = vmul.f32 %v245, %v351
    %v381 = vmul.f32 %v248, %v351
    %v382 = vmul.f32 %v251, %v351
    %v383 = vmul.f32 %v254, %v351
    %v384 = vmul.f32 %v257, %v351
    %v385 = vmul.f32 %v260, %v351
    %v386 = vmul.f32 %v263, %v351
    %v387 = vmul.f32 %v266, %v351
    %v388 = vmul.f32 %v269, %v351
    %v389 = vmul.f32 %v272, %v351
    %v390 = vmul.f32 %v275, %v351
    %v391 = vmul.f32 %v278, %v351
    %v392 = vmul.f32 %v281, %v351
    %v393 = vmul.f32 %v284, %v351
    %v394 = vmul.f32 %v287, %v351
    %v395 = vmul.f32 %v290, %v351
    %v396 = vmul.f32 %v293, %v351
    %v397 = vmul.f32 %v296, %v351
    %v398 = vmul.f32 %v299, %v351
    %v399 = vmul.f32 %v302, %v351
    %v400 = vmul.f32 %v305, %v351
    %v401 = vmul.f32 %v308, %v351
    %v402 = vmul.f32 %v311, %v351
    %v403 = vmul.f32 %v314, %v351
    %v404 = vmul.f32 %v317, %v351
    %v405 = vmul.f32 %v320, %v351
    %v406 = vmul.f32 %v323, %v351
    %v407 = vmul.f32 %v326, %v351
    %v408 = vmul.f32 %v329, %v351
    %v409 = vmul.f32 %v332, %v351
    %v410 = vmul.f32 %v335, %v351
    %v411 = vmul.f32 %v338, %v351
    %v412 = vmul.f32 %v341, %v351
    %v413 = vmul.f32 %v344, %v351
    %v414 = vmul.f32 %v347, %v351
    %v415 = vmul.f32 %v350, %v351
    %v416 = vmul.f32 %v29, %v29
    %v417 = vmul.f32 %v30, %v30
    %v418 = vmul.f32 %v31, %v31
    %v419 = vmul.f32 %v32, %v32
    %v420 = vmul.f32 %v33, %v33
    %v421 = vmul.f32 %v34, %v34
    %v422 = vmul.f32 %v35, %v35
    %v423 = vmul.f32 %v36, %v36
    %v424 = vmul.f32 %v37, %v37
    %v425 = vmul.f32 %v38, %v38
    %v426 = vmul.f32 %v39, %v39
    %v427 = vmul.f32 %v40, %v40
    %v428 = vmul.f32 %v41, %v41
    %v429 = vmul.f32 %v42, %v42
    %v430 = vmul.f32 %v43, %v43
    %v431 = vmul.f32 %v44, %v44
    %v432 = vmul.f32 %v45, %v45
    %v433 = vmul.f32 %v46, %v46
    %v434 = vmul.f32 %v47, %v47
    %v435 = vmul.f32 %v48, %v48
    %v436 = vmul.f32 %v49, %v49
    %v437 = vmul.f32 %v50, %v50
    %v438 = vmul.f32 %v51, %v51
    %v439 = vmul.f32 %v52, %v52
    %v440 = vmul.f32 %v53, %v53
    %v441 = vmul.f32 %v54, %v54
    %v442 = vmul.f32 %v55, %v55
    %v443 = vmul.f32 %v56, %v56
    %v444 = vmul.f32 %v57, %v57
    %v445 = vmul.f32 %v58, %v58
    %v446 = vmul.f32 %v59, %v59
    %v447 = vmul.f32 %v60, %v60
    %v448 = vmul.f32 %v61, %v61
    %v449 = vmul.f32 %v62, %v62
    %v450 = vmul.f32 %v63, %v63
    %v451 = vmul.f32 %v64, %v64
    %v452 = vmul.f32 %v65, %v65
    %v453 = vmul.f32 %v66, %v66
    %v454 = vmul.f32 %v67, %v67
    %v455 = vmul.f32 %v68, %v68
    %v456 = vmul.f32 %v69, %v69
    %v457 = vmul.f32 %v70, %v70
    %v458 = vmul.f32 %v71, %v71
    %v459 = vmul.f32 %v72, %v72
    %v460 = vmul.f32 %v73, %v73
    %v461 = vmul.f32 %v74, %v74
    %v462 = vmul.f32 %v75, %v75
    %v463 = vmul.f32 %v76, %v76
    %v464 = vmul.f32 %v77, %v77
    %v465 = vmul.f32 %v78, %v78
    %v466 = vmul.f32 %v79, %v79
    %v467 = vmul.f32 %v80, %v80
    %v468 = vmul.f32 %v81, %v81
    %v469 = vmul.f32 %v82, %v82
    %v470 = vmul.f32 %v83, %v83
    %v471 = vmul.f32 %v84, %v84
    %v472 = vmul.f32 %v85, %v85
    %v473 = vmul.f32 %v86, %v86
    %v474 = vmul.f32 %v87, %v87
    %v475 = vmul.f32 %v88, %v88
    %v476 = vmul.f32 %v89, %v89
    %v477 = vmul.f32 %v90, %v90
    %v478 = vmul.f32 %v91, %v91
    %v479 = vmul.f32 %v92, %v92
    %v480 = vmul.f32 %v93, %v93
    %v481 = vmul.f32 %v94, %v94
    %v482 = vmul.f32 %v95, %v95
    %v483 = vmul.f32 %v96, %v96
    %v484 = vmul.f32 %v97, %v97
    %v485 = vmul.f32 %v98, %v98
    %v486 = vmul.f32 %v99, %v99
    %v487 = vmul.f32 %v100, %v100
    %v488 = vmul.f32 %v101, %v101
    %v489 = vmul.f32 %v102, %v102
    %v490 = vmul.f32 %v103, %v103
    %v491 = vmul.f32 %v104, %v104
    %v492 = vmul.f32 %v105, %v105
    %v493 = vmul.f32 %v106, %v106
    %v494 = vmul.f32 %v107, %v107
    %v495 = vmul.f32 %v108, %v108
    %v496 = vmul.f32 %v109, %v109
    %v497 = vmul.f32 %v110, %v110
    %v498 = vmul.f32 %v111, %v111
    %v499 = vmul.f32 %v112, %v112
    %v500 = vmul.f32 %v113, %v113
    %v501 = vmul.f32 %v114, %v114
    %v502 = vmul.f32 %v115, %v115
    %v503 = vmul.f32 %v116, %v116
    %v504 = vmul.f32 %v117, %v117
    %v505 = vmul.f32 %v118, %v118
    %v506 = vmul.f32 %v119, %v119
    %v507 = vmul.f32 %v120, %v120
    %v508 = vmul.f32 %v121, %v121
    %v509 = vmul.f32 %v122, %v122
    %v510 = vmul.f32 %v123, %v123
    %v511 = vmul.f32 %v124, %v124
    %v512 = vmul.f32 %v125, %v125
    %v513 = vmul.f32 %v126, %v126
    %v514 = vmul.f32 %v127, %v127
    %v515 = vmul.f32 %v128, %v128
    %v516 = vmul.f32 %v129, %v129
    %v517 = vmul.f32 %v130, %v130
    %v518 = vmul.f32 %v131, %v131
    %v519 = vmul.f32 %v132, %v132
    %v520 = vmul.f32 %v133, %v133
    %v521 = vmul.f32 %v134, %v134
    %v522 = vmul.f32 %v135, %v135
    %v523 = vmul.f32 %v136, %v136
    %v524 = vmul.f32 %v137, %v137
    %v525 = vmul.f32 %v138, %v138
    %v526 = vmul.f32 %v139, %v139
    %v527 = vmul.f32 %v140, %v140
    %v528 = vmul.f32 %v141, %v141
    %v529 = vmul.f32 %v142, %v142
    %v530 = vmul.f32 %v143, %v143
    %v531 = vmul.f32 %v144, %v144
    %v532 = vmul.f32 %v145, %v145
    %v533 = vmul.f32 %v146, %v146
    %v534 = vmul.f32 %v147, %v147
    %v535 = vmul.f32 %v148, %v148
    %v536 = vmul.f32 %v149, %v149
    %v537 = vmul.f32 %v150, %v150
    %v538 = vmul.f32 %v151, %v151
    %v539 = vmul.f32 %v152, %v152
    %v540 = vmul.f32 %v153, %v153
    %v541 = vmul.f32 %v154, %v154
    %v542 = vmul.f32 %v155, %v155
    %v543 = vmul.f32 %v156, %v156
    %v544 = vadd.f32 %v416, %v417
    %545 = vadd.xlane.f32.xlu0 %v544
    %v546 = vpop.xlane.xlu0 %545
    %v547 = vadd.f32 %v418, %v419
    %548 = vadd.xlane.f32.xlu0 %v547
    %v549 = vpop.xlane.xlu0 %548
    %v550 = vadd.f32 %v420, %v421
    %551 = vadd.xlane.f32.xlu0 %v550
    %v552 = vpop.xlane.xlu0 %551
    %v553 = vadd.f32 %v422, %v423
    %554 = vadd.xlane.f32.xlu0 %v553
    %v555 = vpop.xlane.xlu0 %554
    %v556 = vadd.f32 %v424, %v425
    %557 = vadd.xlane.f32.xlu0 %v556
    %v558 = vpop.xlane.xlu0 %557
    %v559 = vadd.f32 %v426, %v427
    %560 = vadd.xlane.f32.xlu0 %v559
    %v561 = vpop.xlane.xlu0 %560
    %v562 = vadd.f32 %v428, %v429
    %563 = vadd.xlane.f32.xlu0 %v562
    %v564 = vpop.xlane.xlu0 %563
    %v565 = vadd.f32 %v430, %v431
    %566 = vadd.xlane.f32.xlu0 %v565
    %v567 = vpop.xlane.xlu0 %566
    %v568 = vadd.f32 %v432, %v433
    %569 = vadd.xlane.f32.xlu0 %v568
    %v570 = vpop.xlane.xlu0 %569
    %v571 = vadd.f32 %v434, %v435
    %572 = vadd.xlane.f32.xlu0 %v571
    %v573 = vpop.xlane.xlu0 %572
    %v574 = vadd.f32 %v436, %v437
    %575 = vadd.xlane.f32.xlu0 %v574
    %v576 = vpop.xlane.xlu0 %575
    %v577 = vadd.f32 %v438, %v439
    %578 = vadd.xlane.f32.xlu0 %v577
    %v579 = vpop.xlane.xlu0 %578
    %v580 = vadd.f32 %v440, %v441
    %581 = vadd.xlane.f32.xlu0 %v580
    %v582 = vpop.xlane.xlu0 %581
    %v583 = vadd.f32 %v442, %v443
    %584 = vadd.xlane.f32.xlu0 %v583
    %v585 = vpop.xlane.xlu0 %584
    %v586 = vadd.f32 %v444, %v445
    %587 = vadd.xlane.f32.xlu0 %v586
    %v588 = vpop.xlane.xlu0 %587
    %v589 = vadd.f32 %v446, %v447
    %590 = vadd.xlane.f32.xlu0 %v589
    %v591 = vpop.xlane.xlu0 %590
    %v592 = vadd.f32 %v448, %v449
    %593 = vadd.xlane.f32.xlu0 %v592
    %v594 = vpop.xlane.xlu0 %593
    %v595 = vadd.f32 %v450, %v451
    %596 = vadd.xlane.f32.xlu0 %v595
    %v597 = vpop.xlane.xlu0 %596
    %v598 = vadd.f32 %v452, %v453
    %599 = vadd.xlane.f32.xlu0 %v598
    %v600 = vpop.xlane.xlu0 %599
    %v601 = vadd.f32 %v454, %v455
    %602 = vadd.xlane.f32.xlu0 %v601
    %v603 = vpop.xlane.xlu0 %602
    %v604 = vadd.f32 %v456, %v457
    %605 = vadd.xlane.f32.xlu0 %v604
    %v606 = vpop.xlane.xlu0 %605
    %v607 = vadd.f32 %v458, %v459
    %608 = vadd.xlane.f32.xlu0 %v607
    %v609 = vpop.xlane.xlu0 %608
    %v610 = vadd.f32 %v460, %v461
    %611 = vadd.xlane.f32.xlu0 %v610
    %v612 = vpop.xlane.xlu0 %611
    %v613 = vadd.f32 %v462, %v463
    %614 = vadd.xlane.f32.xlu0 %v613
    %v615 = vpop.xlane.xlu0 %614
    %v616 = vadd.f32 %v464, %v465
    %617 = vadd.xlane.f32.xlu0 %v616
    %v618 = vpop.xlane.xlu0 %617
    %v619 = vadd.f32 %v466, %v467
    %620 = vadd.xlane.f32.xlu0 %v619
    %v621 = vpop.xlane.xlu0 %620
    %v622 = vadd.f32 %v468, %v469
    %623 = vadd.xlane.f32.xlu0 %v622
    %v624 = vpop.xlane.xlu0 %623
    %v625 = vadd.f32 %v470, %v471
    %626 = vadd.xlane.f32.xlu0 %v625
    %v627 = vpop.xlane.xlu0 %626
    %v628 = vadd.f32 %v472, %v473
    %629 = vadd.xlane.f32.xlu0 %v628
    %v630 = vpop.xlane.xlu0 %629
    %v631 = vadd.f32 %v474, %v475
    %632 = vadd.xlane.f32.xlu0 %v631
    %v633 = vpop.xlane.xlu0 %632
    %v634 = vadd.f32 %v476, %v477
    %635 = vadd.xlane.f32.xlu0 %v634
    %v636 = vpop.xlane.xlu0 %635
    %v637 = vadd.f32 %v478, %v479
    %638 = vadd.xlane.f32.xlu0 %v637
    %v639 = vpop.xlane.xlu0 %638
    %v640 = vadd.f32 %v480, %v481
    %641 = vadd.xlane.f32.xlu0 %v640
    %v642 = vpop.xlane.xlu0 %641
    %v643 = vadd.f32 %v482, %v483
    %644 = vadd.xlane.f32.xlu0 %v643
    %v645 = vpop.xlane.xlu0 %644
    %v646 = vadd.f32 %v484, %v485
    %647 = vadd.xlane.f32.xlu0 %v646
    %v648 = vpop.xlane.xlu0 %647
    %v649 = vadd.f32 %v486, %v487
    %650 = vadd.xlane.f32.xlu0 %v649
    %v651 = vpop.xlane.xlu0 %650
    %v652 = vadd.f32 %v488, %v489
    %653 = vadd.xlane.f32.xlu0 %v652
    %v654 = vpop.xlane.xlu0 %653
    %v655 = vadd.f32 %v490, %v491
    %656 = vadd.xlane.f32.xlu0 %v655
    %v657 = vpop.xlane.xlu0 %656
    %v658 = vadd.f32 %v492, %v493
    %659 = vadd.xlane.f32.xlu0 %v658
    %v660 = vpop.xlane.xlu0 %659
    %v661 = vadd.f32 %v494, %v495
    %662 = vadd.xlane.f32.xlu0 %v661
    %v663 = vpop.xlane.xlu0 %662
    %v664 = vadd.f32 %v496, %v497
    %665 = vadd.xlane.f32.xlu0 %v664
    %v666 = vpop.xlane.xlu0 %665
    %v667 = vadd.f32 %v498, %v499
    %668 = vadd.xlane.f32.xlu0 %v667
    %v669 = vpop.xlane.xlu0 %668
    %v670 = vadd.f32 %v500, %v501
    %671 = vadd.xlane.f32.xlu0 %v670
    %v672 = vpop.xlane.xlu0 %671
    %v673 = vadd.f32 %v502, %v503
    %674 = vadd.xlane.f32.xlu0 %v673
    %v675 = vpop.xlane.xlu0 %674
    %v676 = vadd.f32 %v504, %v505
    %677 = vadd.xlane.f32.xlu0 %v676
    %v678 = vpop.xlane.xlu0 %677
    %v679 = vadd.f32 %v506, %v507
    %680 = vadd.xlane.f32.xlu0 %v679
    %v681 = vpop.xlane.xlu0 %680
    %v682 = vadd.f32 %v508, %v509
    %683 = vadd.xlane.f32.xlu0 %v682
    %v684 = vpop.xlane.xlu0 %683
    %v685 = vadd.f32 %v510, %v511
    %686 = vadd.xlane.f32.xlu0 %v685
    %v687 = vpop.xlane.xlu0 %686
    %v688 = vadd.f32 %v512, %v513
    %689 = vadd.xlane.f32.xlu0 %v688
    %v690 = vpop.xlane.xlu0 %689
    %v691 = vadd.f32 %v514, %v515
    %692 = vadd.xlane.f32.xlu0 %v691
    %v693 = vpop.xlane.xlu0 %692
    %v694 = vadd.f32 %v516, %v517
    %695 = vadd.xlane.f32.xlu0 %v694
    %v696 = vpop.xlane.xlu0 %695
    %v697 = vadd.f32 %v518, %v519
    %698 = vadd.xlane.f32.xlu0 %v697
    %v699 = vpop.xlane.xlu0 %698
    %v700 = vadd.f32 %v520, %v521
    %701 = vadd.xlane.f32.xlu0 %v700
    %v702 = vpop.xlane.xlu0 %701
    %v703 = vadd.f32 %v522, %v523
    %704 = vadd.xlane.f32.xlu0 %v703
    %v705 = vpop.xlane.xlu0 %704
    %v706 = vadd.f32 %v524, %v525
    %707 = vadd.xlane.f32.xlu0 %v706
    %v708 = vpop.xlane.xlu0 %707
    %v709 = vadd.f32 %v526, %v527
    %710 = vadd.xlane.f32.xlu0 %v709
    %v711 = vpop.xlane.xlu0 %710
    %v712 = vadd.f32 %v528, %v529
    %713 = vadd.xlane.f32.xlu0 %v712
    %v714 = vpop.xlane.xlu0 %713
    %v715 = vadd.f32 %v530, %v531
    %716 = vadd.xlane.f32.xlu0 %v715
    %v717 = vpop.xlane.xlu0 %716
    %v718 = vadd.f32 %v532, %v533
    %719 = vadd.xlane.f32.xlu0 %v718
    %v720 = vpop.xlane.xlu0 %719
    %v721 = vadd.f32 %v534, %v535
    %722 = vadd.xlane.f32.xlu0 %v721
    %v723 = vpop.xlane.xlu0 %722
    %v724 = vadd.f32 %v536, %v537
    %725 = vadd.xlane.f32.xlu0 %v724
    %v726 = vpop.xlane.xlu0 %725
    %v727 = vadd.f32 %v538, %v539
    %728 = vadd.xlane.f32.xlu0 %v727
    %v729 = vpop.xlane.xlu0 %728
    %v730 = vadd.f32 %v540, %v541
    %731 = vadd.xlane.f32.xlu0 %v730
    %v732 = vpop.xlane.xlu0 %731
    %v733 = vadd.f32 %v542, %v543
    %734 = vadd.xlane.f32.xlu0 %v733
    %v735 = vpop.xlane.xlu0 %734
    %v736 = vmul.f32 %v546, %v351
    %v737 = vmul.f32 %v549, %v351
    %v738 = vmul.f32 %v552, %v351
    %v739 = vmul.f32 %v555, %v351
    %v740 = vmul.f32 %v558, %v351
    %v741 = vmul.f32 %v561, %v351
    %v742 = vmul.f32 %v564, %v351
    %v743 = vmul.f32 %v567, %v351
    %v744 = vmul.f32 %v570, %v351
    %v745 = vmul.f32 %v573, %v351
    %v746 = vmul.f32 %v576, %v351
    %v747 = vmul.f32 %v579, %v351
    %v748 = vmul.f32 %v582, %v351
    %v749 = vmul.f32 %v585, %v351
    %v750 = vmul.f32 %v588, %v351
    %v751 = vmul.f32 %v591, %v351
    %v752 = vmul.f32 %v594, %v351
    %v753 = vmul.f32 %v597, %v351
    %v754 = vmul.f32 %v600, %v351
    %v755 = vmul.f32 %v603, %v351
    %v756 = vmul.f32 %v606, %v351
    %v757 = vmul.f32 %v609, %v351
    %v758 = vmul.f32 %v612, %v351
    %v759 = vmul.f32 %v615, %v351
    %v760 = vmul.f32 %v618, %v351
    %v761 = vmul.f32 %v621, %v351
    %v762 = vmul.f32 %v624, %v351
    %v763 = vmul.f32 %v627, %v351
    %v764 = vmul.f32 %v630, %v351
    %v765 = vmul.f32 %v633, %v351
    %v766 = vmul.f32 %v636, %v351
    %v767 = vmul.f32 %v639, %v351
    %v768 = vmul.f32 %v642, %v351
    %v769 = vmul.f32 %v645, %v351
    %v770 = vmul.f32 %v648, %v351
    %v771 = vmul.f32 %v651, %v351
    %v772 = vmul.f32 %v654, %v351
    %v773 = vmul.f32 %v657, %v351
    %v774 = vmul.f32 %v660, %v351
    %v775 = vmul.f32 %v663, %v351
    %v776 = vmul.f32 %v666, %v351
    %v777 = vmul.f32 %v669, %v351
    %v778 = vmul.f32 %v672, %v351
    %v779 = vmul.f32 %v675, %v351
    %v780 = vmul.f32 %v678, %v351
    %v781 = vmul.f32 %v681, %v351
    %v782 = vmul.f32 %v684, %v351
    %v783 = vmul.f32 %v687, %v351
    %v784 = vmul.f32 %v690, %v351
    %v785 = vmul.f32 %v693, %v351
    %v786 = vmul.f32 %v696, %v351
    %v787 = vmul.f32 %v699, %v351
    %v788 = vmul.f32 %v702, %v351
    %v789 = vmul.f32 %v705, %v351
    %v790 = vmul.f32 %v708, %v351
    %v791 = vmul.f32 %v711, %v351
    %v792 = vmul.f32 %v714, %v351
    %v793 = vmul.f32 %v717, %v351
    %v794 = vmul.f32 %v720, %v351
    %v795 = vmul.f32 %v723, %v351
    %v796 = vmul.f32 %v726, %v351
    %v797 = vmul.f32 %v729, %v351
    %v798 = vmul.f32 %v732, %v351
    %v799 = vmul.f32 %v735, %v351
    %v800 = vmul.f32 %v352, %v352
    %v801 = vmul.f32 %v353, %v353
    %v802 = vmul.f32 %v354, %v354
    %v803 = vmul.f32 %v355, %v355
    %v804 = vmul.f32 %v356, %v356
    %v805 = vmul.f32 %v357, %v357
    %v806 = vmul.f32 %v358, %v358
    %v807 = vmul.f32 %v359, %v359
    %v808 = vmul.f32 %v360, %v360
    %v809 = vmul.f32 %v361, %v361
    %v810 = vmul.f32 %v362, %v362
    %v811 = vmul.f32 %v363, %v363
    %v812 = vmul.f32 %v364, %v364
    %v813 = vmul.f32 %v365, %v365
    %v814 = vmul.f32 %v366, %v366
    %v815 = vmul.f32 %v367, %v367
    %v816 = vmul.f32 %v368, %v368
    %v817 = vmul.f32 %v369, %v369
    %v818 = vmul.f32 %v370, %v370
    %v819 = vmul.f32 %v371, %v371
    %v820 = vmul.f32 %v372, %v372
    %v821 = vmul.f32 %v373, %v373
    %v822 = vmul.f32 %v374, %v374
    %v823 = vmul.f32 %v375, %v375
    %v824 = vmul.f32 %v376, %v376
    %v825 = vmul.f32 %v377, %v377
    %v826 = vmul.f32 %v378, %v378
    %v827 = vmul.f32 %v379, %v379
    %v828 = vmul.f32 %v380, %v380
    %v829 = vmul.f32 %v381, %v381
    %v830 = vmul.f32 %v382, %v382
    %v831 = vmul.f32 %v383, %v383
    %v832 = vmul.f32 %v384, %v384
    %v833 = vmul.f32 %v385, %v385
    %v834 = vmul.f32 %v386, %v386
    %v835 = vmul.f32 %v387, %v387
    %v836 = vmul.f32 %v388, %v388
    %v837 = vmul.f32 %v389, %v389
    %v838 = vmul.f32 %v390, %v390
    %v839 = vmul.f32 %v391, %v391
    %v840 = vmul.f32 %v392, %v392
    %v841 = vmul.f32 %v393, %v393
    %v842 = vmul.f32 %v394, %v394
    %v843 = vmul.f32 %v395, %v395
    %v844 = vmul.f32 %v396, %v396
    %v845 = vmul.f32 %v397, %v397
    %v846 = vmul.f32 %v398, %v398
    %v847 = vmul.f32 %v399, %v399
    %v848 = vmul.f32 %v400, %v400
    %v849 = vmul.f32 %v401, %v401
    %v850 = vmul.f32 %v402, %v402
    %v851 = vmul.f32 %v403, %v403
    %v852 = vmul.f32 %v404, %v404
    %v853 = vmul.f32 %v405, %v405
    %v854 = vmul.f32 %v406, %v406
    %v855 = vmul.f32 %v407, %v407
    %v856 = vmul.f32 %v408, %v408
    %v857 = vmul.f32 %v409, %v409
    %v858 = vmul.f32 %v410, %v410
    %v859 = vmul.f32 %v411, %v411
    %v860 = vmul.f32 %v412, %v412
    %v861 = vmul.f32 %v413, %v413
    %v862 = vmul.f32 %v414, %v414
    %v863 = vmul.f32 %v415, %v415
    %v864 = vsub.f32 %v736, %v800
    %v865 = vsub.f32 %v737, %v801
    %v866 = vsub.f32 %v738, %v802
    %v867 = vsub.f32 %v739, %v803
    %v868 = vsub.f32 %v740, %v804
    %v869 = vsub.f32 %v741, %v805
    %v870 = vsub.f32 %v742, %v806
    %v871 = vsub.f32 %v743, %v807
    %v872 = vsub.f32 %v744, %v808
    %v873 = vsub.f32 %v745, %v809
    %v874 = vsub.f32 %v746, %v810
    %v875 = vsub.f32 %v747, %v811
    %v876 = vsub.f32 %v748, %v812
    %v877 = vsub.f32 %v749, %v813
    %v878 = vsub.f32 %v750, %v814
    %v879 = vsub.f32 %v751, %v815
    %v880 = vsub.f32 %v752, %v816
    %v881 = vsub.f32 %v753, %v817
    %v882 = vsub.f32 %v754, %v818
    %v883 = vsub.f32 %v755, %v819
    %v884 = vsub.f32 %v756, %v820
    %v885 = vsub.f32 %v757, %v821
    %v886 = vsub.f32 %v758, %v822
    %v887 = vsub.f32 %v759, %v823
    %v888 = vsub.f32 %v760, %v824
    %v889 = vsub.f32 %v761, %v825
    %v890 = vsub.f32 %v762, %v826
    %v891 = vsub.f32 %v763, %v827
    %v892 = vsub.f32 %v764, %v828
    %v893 = vsub.f32 %v765, %v829
    %v894 = vsub.f32 %v766, %v830
    %v895 = vsub.f32 %v767, %v831
    %v896 = vsub.f32 %v768, %v832
    %v897 = vsub.f32 %v769, %v833
    %v898 = vsub.f32 %v770, %v834
    %v899 = vsub.f32 %v771, %v835
    %v900 = vsub.f32 %v772, %v836
    %v901 = vsub.f32 %v773, %v837
    %v902 = vsub.f32 %v774, %v838
    %v903 = vsub.f32 %v775, %v839
    %v904 = vsub.f32 %v776, %v840
    %v905 = vsub.f32 %v777, %v841
    %v906 = vsub.f32 %v778, %v842
    %v907 = vsub.f32 %v779, %v843
    %v908 = vsub.f32 %v780, %v844
    %v909 = vsub.f32 %v781, %v845
    %v910 = vsub.f32 %v782, %v846
    %v911 = vsub.f32 %v783, %v847
    %v912 = vsub.f32 %v784, %v848
    %v913 = vsub.f32 %v785, %v849
    %v914 = vsub.f32 %v786, %v850
    %v915 = vsub.f32 %v787, %v851
    %v916 = vsub.f32 %v788, %v852
    %v917 = vsub.f32 %v789, %v853
    %v918 = vsub.f32 %v790, %v854
    %v919 = vsub.f32 %v791, %v855
    %v920 = vsub.f32 %v792, %v856
    %v921 = vsub.f32 %v793, %v857
    %v922 = vsub.f32 %v794, %v858
    %v923 = vsub.f32 %v795, %v859
    %v924 = vsub.f32 %v796, %v860
    %v925 = vsub.f32 %v797, %v861
    %v926 = vsub.f32 %v798, %v862
    %v927 = vsub.f32 %v799, %v863
    %v928 = vsub.f32 %v29, %v352
    %v929 = vsub.f32 %v30, %v352
    %v930 = vsub.f32 %v31, %v353
    %v931 = vsub.f32 %v32, %v353
    %v932 = vsub.f32 %v33, %v354
    %v933 = vsub.f32 %v34, %v354
    %v934 = vsub.f32 %v35, %v355
    %v935 = vsub.f32 %v36, %v355
    %v936 = vsub.f32 %v37, %v356
    %v937 = vsub.f32 %v38, %v356
    %v938 = vsub.f32 %v39, %v357
    %v939 = vsub.f32 %v40, %v357
    %v940 = vsub.f32 %v41, %v358
    %v941 = vsub.f32 %v42, %v358
    %v942 = vsub.f32 %v43, %v359
    %v943 = vsub.f32 %v44, %v359
    %v944 = vsub.f32 %v45, %v360
    %v945 = vsub.f32 %v46, %v360
    %v946 = vsub.f32 %v47, %v361
    %v947 = vsub.f32 %v48, %v361
    %v948 = vsub.f32 %v49, %v362
    %v949 = vsub.f32 %v50, %v362
    %v950 = vsub.f32 %v51, %v363
    %v951 = vsub.f32 %v52, %v363
    %v952 = vsub.f32 %v53, %v364
    %v953 = vsub.f32 %v54, %v364
    %v954 = vsub.f32 %v55, %v365
    %v955 = vsub.f32 %v56, %v365
    %v956 = vsub.f32 %v57, %v366
    %v957 = vsub.f32 %v58, %v366
    %v958 = vsub.f32 %v59, %v367
    %v959 = vsub.f32 %v60, %v367
    %v960 = vsub.f32 %v61, %v368
    %v961 = vsub.f32 %v62, %v368
    %v962 = vsub.f32 %v63, %v369
    %v963 = vsub.f32 %v64, %v369
    %v964 = vsub.f32 %v65, %v370
    %v965 = vsub.f32 %v66, %v370
    %v966 = vsub.f32 %v67, %v371
    %v967 = vsub.f32 %v68, %v371
    %v968 = vsub.f32 %v69, %v372
    %v969 = vsub.f32 %v70, %v372
    %v970 = vsub.f32 %v71, %v373
    %v971 = vsub.f32 %v72, %v373
    %v972 = vsub.f32 %v73, %v374
    %v973 = vsub.f32 %v74, %v374
    %v974 = vsub.f32 %v75, %v375
    %v975 = vsub.f32 %v76, %v375
    %v976 = vsub.f32 %v77, %v376
    %v977 = vsub.f32 %v78, %v376
    %v978 = vsub.f32 %v79, %v377
    %v979 = vsub.f32 %v80, %v377
    %v980 = vsub.f32 %v81, %v378
    %v981 = vsub.f32 %v82, %v378
    %v982 = vsub.f32 %v83, %v379
    %v983 = vsub.f32 %v84, %v379
    %v984 = vsub.f32 %v85, %v380
    %v985 = vsub.f32 %v86, %v380
    %v986 = vsub.f32 %v87, %v381
    %v987 = vsub.f32 %v88, %v381
    %v988 = vsub.f32 %v89, %v382
    %v989 = vsub.f32 %v90, %v382
    %v990 = vsub.f32 %v91, %v383
    %v991 = vsub.f32 %v92, %v383
    %v992 = vsub.f32 %v93, %v384
    %v993 = vsub.f32 %v94, %v384
    %v994 = vsub.f32 %v95, %v385
    %v995 = vsub.f32 %v96, %v385
    %v996 = vsub.f32 %v97, %v386
    %v997 = vsub.f32 %v98, %v386
    %v998 = vsub.f32 %v99, %v387
    %v999 = vsub.f32 %v100, %v387
    %v1000 = vsub.f32 %v101, %v388
    %v1001 = vsub.f32 %v102, %v388
    %v1002 = vsub.f32 %v103, %v389
    %v1003 = vsub.f32 %v104, %v389
    %v1004 = vsub.f32 %v105, %v390
    %v1005 = vsub.f32 %v106, %v390
    %v1006 = vsub.f32 %v107, %v391
    %v1007 = vsub.f32 %v108, %v391
    %v1008 = vsub.f32 %v109, %v392
    %v1009 = vsub.f32 %v110, %v392
    %v1010 = vsub.f32 %v111, %v393
    %v1011 = vsub.f32 %v112, %v393
    %v1012 = vsub.f32 %v113, %v394
    %v1013 = vsub.f32 %v114, %v394
    %v1014 = vsub.f32 %v115, %v395
    %v1015 = vsub.f32 %v116, %v395
    %v1016 = vsub.f32 %v117, %v396
    %v1017 = vsub.f32 %v118, %v396
    %v1018 = vsub.f32 %v119, %v397
    %v1019 = vsub.f32 %v120, %v397
    %v1020 = vsub.f32 %v121, %v398
    %v1021 = vsub.f32 %v122, %v398
    %v1022 = vsub.f32 %v123, %v399
    %v1023 = vsub.f32 %v124, %v399
    %v1024 = vsub.f32 %v125, %v400
    %v1025 = vsub.f32 %v126, %v400
    %v1026 = vsub.f32 %v127, %v401
    %v1027 = vsub.f32 %v128, %v401
    %v1028 = vsub.f32 %v129, %v402
    %v1029 = vsub.f32 %v130, %v402
    %v1030 = vsub.f32 %v131, %v403
    %v1031 = vsub.f32 %v132, %v403
    %v1032 = vsub.f32 %v133, %v404
    %v1033 = vsub.f32 %v134, %v404
    %v1034 = vsub.f32 %v135, %v405
    %v1035 = vsub.f32 %v136, %v405
    %v1036 = vsub.f32 %v137, %v406
    %v1037 = vsub.f32 %v138, %v406
    %v1038 = vsub.f32 %v139, %v407
    %v1039 = vsub.f32 %v140, %v407
    %v1040 = vsub.f32 %v141, %v408
    %v1041 = vsub.f32 %v142, %v408
    %v1042 = vsub.f32 %v143, %v409
    %v1043 = vsub.f32 %v144, %v409
    %v1044 = vsub.f32 %v145, %v410
    %v1045 = vsub.f32 %v146, %v410
    %v1046 = vsub.f32 %v147, %v411
    %v1047 = vsub.f32 %v148, %v411
    %v1048 = vsub.f32 %v149, %v412
    %v1049 = vsub.f32 %v150, %v412
    %v1050 = vsub.f32 %v151, %v413
    %v1051 = vsub.f32 %v152, %v413
    %v1052 = vsub.f32 %v153, %v414
    %v1053 = vsub.f32 %v154, %v414
    %v1054 = vsub.f32 %v155, %v415
    %v1055 = vsub.f32 %v156, %v415
    %v1056 = vadd.f32 %v864, 1e-05
    %v1057 = vadd.f32 %v865, 1e-05
    %v1058 = vadd.f32 %v866, 1e-05
    %v1059 = vadd.f32 %v867, 1e-05
    %v1060 = vadd.f32 %v868, 1e-05
    %v1061 = vadd.f32 %v869, 1e-05
    %v1062 = vadd.f32 %v870, 1e-05
    %v1063 = vadd.f32 %v871, 1e-05
    %v1064 = vadd.f32 %v872, 1e-05
    %v1065 = vadd.f32 %v873, 1e-05
    %v1066 = vadd.f32 %v874, 1e-05
    %v1067 = vadd.f32 %v875, 1e-05
    %v1068 = vadd.f32 %v876, 1e-05
    %v1069 = vadd.f32 %v877, 1e-05
    %v1070 = vadd.f32 %v878, 1e-05
    %v1071 = vadd.f32 %v879, 1e-05
    %v1072 = vadd.f32 %v880, 1e-05
    %v1073 = vadd.f32 %v881, 1e-05
    %v1074 = vadd.f32 %v882, 1e-05
    %v1075 = vadd.f32 %v883, 1e-05
    %v1076 = vadd.f32 %v884, 1e-05
    %v1077 = vadd.f32 %v885, 1e-05
    %v1078 = vadd.f32 %v886, 1e-05
    %v1079 = vadd.f32 %v887, 1e-05
    %v1080 = vadd.f32 %v888, 1e-05
    %v1081 = vadd.f32 %v889, 1e-05
    %v1082 = vadd.f32 %v890, 1e-05
    %v1083 = vadd.f32 %v891, 1e-05
    %v1084 = vadd.f32 %v892, 1e-05
    %v1085 = vadd.f32 %v893, 1e-05
    %v1086 = vadd.f32 %v894, 1e-05
    %v1087 = vadd.f32 %v895, 1e-05
    %v1088 = vadd.f32 %v896, 1e-05
    %v1089 = vadd.f32 %v897, 1e-05
    %v1090 = vadd.f32 %v898, 1e-05
    %v1091 = vadd.f32 %v899, 1e-05
    %v1092 = vadd.f32 %v900, 1e-05
    %v1093 = vadd.f32 %v901, 1e-05
    %v1094 = vadd.f32 %v902, 1e-05
    %v1095 = vadd.f32 %v903, 1e-05
    %v1096 = vadd.f32 %v904, 1e-05
    %v1097 = vadd.f32 %v905, 1e-05
    %v1098 = vadd.f32 %v906, 1e-05
    %v1099 = vadd.f32 %v907, 1e-05
    %v1100 = vadd.f32 %v908, 1e-05
    %v1101 = vadd.f32 %v909, 1e-05
    %v1102 = vadd.f32 %v910, 1e-05
    %v1103 = vadd.f32 %v911, 1e-05
    %v1104 = vadd.f32 %v912, 1e-05
    %v1105 = vadd.f32 %v913, 1e-05
    %v1106 = vadd.f32 %v914, 1e-05
    %v1107 = vadd.f32 %v915, 1e-05
    %v1108 = vadd.f32 %v916, 1e-05
    %v1109 = vadd.f32 %v917, 1e-05
    %v1110 = vadd.f32 %v918, 1e-05
    %v1111 = vadd.f32 %v919, 1e-05
    %v1112 = vadd.f32 %v920, 1e-05
    %v1113 = vadd.f32 %v921, 1e-05
    %v1114 = vadd.f32 %v922, 1e-05
    %v1115 = vadd.f32 %v923, 1e-05
    %v1116 = vadd.f32 %v924, 1e-05
    %v1117 = vadd.f32 %v925, 1e-05
    %v1118 = vadd.f32 %v926, 1e-05
    %v1119 = vadd.f32 %v927, 1e-05
    %v1120 = vrsqrt.pop %v1056
    %v1121 = vrsqrt.pop %v1057
    %v1122 = vrsqrt.pop %v1058
    %v1123 = vrsqrt.pop %v1059
    %v1124 = vrsqrt.pop %v1060
    %v1125 = vrsqrt.pop %v1061
    %v1126 = vrsqrt.pop %v1062
    %v1127 = vrsqrt.pop %v1063
    %v1128 = vrsqrt.pop %v1064
    %v1129 = vrsqrt.pop %v1065
    %v1130 = vrsqrt.pop %v1066
    %v1131 = vrsqrt.pop %v1067
    %v1132 = vrsqrt.pop %v1068
    %v1133 = vrsqrt.pop %v1069
    %v1134 = vrsqrt.pop %v1070
    %v1135 = vrsqrt.pop %v1071
    %v1136 = vrsqrt.pop %v1072
    %v1137 = vrsqrt.pop %v1073
    %v1138 = vrsqrt.pop %v1074
    %v1139 = vrsqrt.pop %v1075
    %v1140 = vrsqrt.pop %v1076
    %v1141 = vrsqrt.pop %v1077
    %v1142 = vrsqrt.pop %v1078
    %v1143 = vrsqrt.pop %v1079
    %v1144 = vrsqrt.pop %v1080
    %v1145 = vrsqrt.pop %v1081
    %v1146 = vrsqrt.pop %v1082
    %v1147 = vrsqrt.pop %v1083
    %v1148 = vrsqrt.pop %v1084
    %v1149 = vrsqrt.pop %v1085
    %v1150 = vrsqrt.pop %v1086
    %v1151 = vrsqrt.pop %v1087
    %v1152 = vrsqrt.pop %v1088
    %v1153 = vrsqrt.pop %v1089
    %v1154 = vrsqrt.pop %v1090
    %v1155 = vrsqrt.pop %v1091
    %v1156 = vrsqrt.pop %v1092
    %v1157 = vrsqrt.pop %v1093
    %v1158 = vrsqrt.pop %v1094
    %v1159 = vrsqrt.pop %v1095
    %v1160 = vrsqrt.pop %v1096
    %v1161 = vrsqrt.pop %v1097
    %v1162 = vrsqrt.pop %v1098
    %v1163 = vrsqrt.pop %v1099
    %v1164 = vrsqrt.pop %v1100
    %v1165 = vrsqrt.pop %v1101
    %v1166 = vrsqrt.pop %v1102
    %v1167 = vrsqrt.pop %v1103
    %v1168 = vrsqrt.pop %v1104
    %v1169 = vrsqrt.pop %v1105
    %v1170 = vrsqrt.pop %v1106
    %v1171 = vrsqrt.pop %v1107
    %v1172 = vrsqrt.pop %v1108
    %v1173 = vrsqrt.pop %v1109
    %v1174 = vrsqrt.pop %v1110
    %v1175 = vrsqrt.pop %v1111
    %v1176 = vrsqrt.pop %v1112
    %v1177 = vrsqrt.pop %v1113
    %v1178 = vrsqrt.pop %v1114
    %v1179 = vrsqrt.pop %v1115
    %v1180 = vrsqrt.pop %v1116
    %v1181 = vrsqrt.pop %v1117
    %v1182 = vrsqrt.pop %v1118
    %v1183 = vrsqrt.pop %v1119
    %v1184 = vmul.f32 %v928, %v1120
    %v1185 = vmul.f32 %v929, %v1120
    %v1186 = vmul.f32 %v930, %v1121
    %v1187 = vmul.f32 %v931, %v1121
    %v1188 = vmul.f32 %v932, %v1122
    %v1189 = vmul.f32 %v933, %v1122
    %v1190 = vmul.f32 %v934, %v1123
    %v1191 = vmul.f32 %v935, %v1123
    %v1192 = vmul.f32 %v936, %v1124
    %v1193 = vmul.f32 %v937, %v1124
    %v1194 = vmul.f32 %v938, %v1125
    %v1195 = vmul.f32 %v939, %v1125
    %v1196 = vmul.f32 %v940, %v1126
    %v1197 = vmul.f32 %v941, %v1126
    %v1198 = vmul.f32 %v942, %v1127
    %v1199 = vmul.f32 %v943, %v1127
    %v1200 = vmul.f32 %v944, %v1128
    %v1201 = vmul.f32 %v945, %v1128
    %v1202 = vmul.f32 %v946, %v1129
    %v1203 = vmul.f32 %v947, %v1129
    %v1204 = vmul.f32 %v948, %v1130
    %v1205 = vmul.f32 %v949, %v1130
    %v1206 = vmul.f32 %v950, %v1131
    %v1207 = vmul.f32 %v951, %v1131
    %v1208 = vmul.f32 %v952, %v1132
    %v1209 = vmul.f32 %v953, %v1132
    %v1210 = vmul.f32 %v954, %v1133
    %v1211 = vmul.f32 %v955, %v1133
    %v1212 = vmul.f32 %v956, %v1134
    %v1213 = vmul.f32 %v957, %v1134
    %v1214 = vmul.f32 %v958, %v1135
    %v1215 = vmul.f32 %v959, %v1135
    %v1216 = vmul.f32 %v960, %v1136
    %v1217 = vmul.f32 %v961, %v1136
    %v1218 = vmul.f32 %v962, %v1137
    %v1219 = vmul.f32 %v963, %v1137
    %v1220 = vmul.f32 %v964, %v1138
    %v1221 = vmul.f32 %v965, %v1138
    %v1222 = vmul.f32 %v966, %v1139
    %v1223 = vmul.f32 %v967, %v1139
    %v1224 = vmul.f32 %v968, %v1140
    %v1225 = vmul.f32 %v969, %v1140
    %v1226 = vmul.f32 %v970, %v1141
    %v1227 = vmul.f32 %v971, %v1141
    %v1228 = vmul.f32 %v972, %v1142
    %v1229 = vmul.f32 %v973, %v1142
    %v1230 = vmul.f32 %v974, %v1143
    %v1231 = vmul.f32 %v975, %v1143
    %v1232 = vmul.f32 %v976, %v1144
    %v1233 = vmul.f32 %v977, %v1144
    %v1234 = vmul.f32 %v978, %v1145
    %v1235 = vmul.f32 %v979, %v1145
    %v1236 = vmul.f32 %v980, %v1146
    %v1237 = vmul.f32 %v981, %v1146
    %v1238 = vmul.f32 %v982, %v1147
    %v1239 = vmul.f32 %v983, %v1147
    %v1240 = vmul.f32 %v984, %v1148
    %v1241 = vmul.f32 %v985, %v1148
    %v1242 = vmul.f32 %v986, %v1149
    %v1243 = vmul.f32 %v987, %v1149
    %v1244 = vmul.f32 %v988, %v1150
    %v1245 = vmul.f32 %v989, %v1150
    %v1246 = vmul.f32 %v990, %v1151
    %v1247 = vmul.f32 %v991, %v1151
    %v1248 = vmul.f32 %v992, %v1152
    %v1249 = vmul.f32 %v993, %v1152
    %v1250 = vmul.f32 %v994, %v1153
    %v1251 = vmul.f32 %v995, %v1153
    %v1252 = vmul.f32 %v996, %v1154
    %v1253 = vmul.f32 %v997, %v1154
    %v1254 = vmul.f32 %v998, %v1155
    %v1255 = vmul.f32 %v999, %v1155
    %v1256 = vmul.f32 %v1000, %v1156
    %v1257 = vmul.f32 %v1001, %v1156
    %v1258 = vmul.f32 %v1002, %v1157
    %v1259 = vmul.f32 %v1003, %v1157
    %v1260 = vmul.f32 %v1004, %v1158
    %v1261 = vmul.f32 %v1005, %v1158
    %v1262 = vmul.f32 %v1006, %v1159
    %v1263 = vmul.f32 %v1007, %v1159
    %v1264 = vmul.f32 %v1008, %v1160
    %v1265 = vmul.f32 %v1009, %v1160
    %v1266 = vmul.f32 %v1010, %v1161
    %v1267 = vmul.f32 %v1011, %v1161
    %v1268 = vmul.f32 %v1012, %v1162
    %v1269 = vmul.f32 %v1013, %v1162
    %v1270 = vmul.f32 %v1014, %v1163
    %v1271 = vmul.f32 %v1015, %v1163
    %v1272 = vmul.f32 %v1016, %v1164
    %v1273 = vmul.f32 %v1017, %v1164
    %v1274 = vmul.f32 %v1018, %v1165
    %v1275 = vmul.f32 %v1019, %v1165
    %v1276 = vmul.f32 %v1020, %v1166
    %v1277 = vmul.f32 %v1021, %v1166
    %v1278 = vmul.f32 %v1022, %v1167
    %v1279 = vmul.f32 %v1023, %v1167
    %v1280 = vmul.f32 %v1024, %v1168
    %v1281 = vmul.f32 %v1025, %v1168
    %v1282 = vmul.f32 %v1026, %v1169
    %v1283 = vmul.f32 %v1027, %v1169
    %v1284 = vmul.f32 %v1028, %v1170
    %v1285 = vmul.f32 %v1029, %v1170
    %v1286 = vmul.f32 %v1030, %v1171
    %v1287 = vmul.f32 %v1031, %v1171
    %v1288 = vmul.f32 %v1032, %v1172
    %v1289 = vmul.f32 %v1033, %v1172
    %v1290 = vmul.f32 %v1034, %v1173
    %v1291 = vmul.f32 %v1035, %v1173
    %v1292 = vmul.f32 %v1036, %v1174
    %v1293 = vmul.f32 %v1037, %v1174
    %v1294 = vmul.f32 %v1038, %v1175
    %v1295 = vmul.f32 %v1039, %v1175
    %v1296 = vmul.f32 %v1040, %v1176
    %v1297 = vmul.f32 %v1041, %v1176
    %v1298 = vmul.f32 %v1042, %v1177
    %v1299 = vmul.f32 %v1043, %v1177
    %v1300 = vmul.f32 %v1044, %v1178
    %v1301 = vmul.f32 %v1045, %v1178
    %v1302 = vmul.f32 %v1046, %v1179
    %v1303 = vmul.f32 %v1047, %v1179
    %v1304 = vmul.f32 %v1048, %v1180
    %v1305 = vmul.f32 %v1049, %v1180
    %v1306 = vmul.f32 %v1050, %v1181
    %v1307 = vmul.f32 %v1051, %v1181
    %v1308 = vmul.f32 %v1052, %v1182
    %v1309 = vmul.f32 %v1053, %v1182
    %v1310 = vmul.f32 %v1054, %v1183
    %v1311 = vmul.f32 %v1055, %v1183
    %v1313 = vlaneseq
    %v1314 = vshrl.u32 %v1313, 7
    %v1315 = vsub.s32 0, %v1314
    %v1316 = vrot.slane %v157, %v1315
    %v1317 = vlaneseq
    %v1318 = vshrl.u32 %v1317, 7
    %v1319 = vsub.s32 1, %v1318
    %v1320 = vrot.slane %v157, %v1319
    %v1323 = vmul.f32 %v1184, %v1316
    %v1324 = vmul.f32 %v1185, %v1320
    %v1325 = vmul.f32 %v1186, %v1316
    %v1326 = vmul.f32 %v1187, %v1320
    %v1327 = vmul.f32 %v1188, %v1316
    %v1328 = vmul.f32 %v1189, %v1320
    %v1329 = vmul.f32 %v1190, %v1316
    %v1330 = vmul.f32 %v1191, %v1320
    %v1331 = vmul.f32 %v1192, %v1316
    %v1332 = vmul.f32 %v1193, %v1320
    %v1333 = vmul.f32 %v1194, %v1316
    %v1334 = vmul.f32 %v1195, %v1320
    %v1335 = vmul.f32 %v1196, %v1316
    %v1336 = vmul.f32 %v1197, %v1320
    %v1337 = vmul.f32 %v1198, %v1316
    %v1338 = vmul.f32 %v1199, %v1320
    %v1339 = vmul.f32 %v1200, %v1316
    %v1340 = vmul.f32 %v1201, %v1320
    %v1341 = vmul.f32 %v1202, %v1316
    %v1342 = vmul.f32 %v1203, %v1320
    %v1343 = vmul.f32 %v1204, %v1316
    %v1344 = vmul.f32 %v1205, %v1320
    %v1345 = vmul.f32 %v1206, %v1316
    %v1346 = vmul.f32 %v1207, %v1320
    %v1347 = vmul.f32 %v1208, %v1316
    %v1348 = vmul.f32 %v1209, %v1320
    %v1349 = vmul.f32 %v1210, %v1316
    %v1350 = vmul.f32 %v1211, %v1320
    %v1351 = vmul.f32 %v1212, %v1316
    %v1352 = vmul.f32 %v1213, %v1320
    %v1353 = vmul.f32 %v1214, %v1316
    %v1354 = vmul.f32 %v1215, %v1320
    %v1355 = vmul.f32 %v1216, %v1316
    %v1356 = vmul.f32 %v1217, %v1320
    %v1357 = vmul.f32 %v1218, %v1316
    %v1358 = vmul.f32 %v1219, %v1320
    %v1359 = vmul.f32 %v1220, %v1316
    %v1360 = vmul.f32 %v1221, %v1320
    %v1361 = vmul.f32 %v1222, %v1316
    %v1362 = vmul.f32 %v1223, %v1320
    %v1363 = vmul.f32 %v1224, %v1316
    %v1364 = vmul.f32 %v1225, %v1320
    %v1365 = vmul.f32 %v1226, %v1316
    %v1366 = vmul.f32 %v1227, %v1320
    %v1367 = vmul.f32 %v1228, %v1316
    %v1368 = vmul.f32 %v1229, %v1320
    %v1369 = vmul.f32 %v1230, %v1316
    %v1370 = vmul.f32 %v1231, %v1320
    %v1371 = vmul.f32 %v1232, %v1316
    %v1372 = vmul.f32 %v1233, %v1320
    %v1373 = vmul.f32 %v1234, %v1316
    %v1374 = vmul.f32 %v1235, %v1320
    %v1375 = vmul.f32 %v1236, %v1316
    %v1376 = vmul.f32 %v1237, %v1320
    %v1377 = vmul.f32 %v1238, %v1316
    %v1378 = vmul.f32 %v1239, %v1320
    %v1379 = vmul.f32 %v1240, %v1316
    %v1380 = vmul.f32 %v1241, %v1320
    %v1381 = vmul.f32 %v1242, %v1316
    %v1382 = vmul.f32 %v1243, %v1320
    %v1383 = vmul.f32 %v1244, %v1316
    %v1384 = vmul.f32 %v1245, %v1320
    %v1385 = vmul.f32 %v1246, %v1316
    %v1386 = vmul.f32 %v1247, %v1320
    %v1387 = vmul.f32 %v1248, %v1316
    %v1388 = vmul.f32 %v1249, %v1320
    %v1389 = vmul.f32 %v1250, %v1316
    %v1390 = vmul.f32 %v1251, %v1320
    %v1391 = vmul.f32 %v1252, %v1316
    %v1392 = vmul.f32 %v1253, %v1320
    %v1393 = vmul.f32 %v1254, %v1316
    %v1394 = vmul.f32 %v1255, %v1320
    %v1395 = vmul.f32 %v1256, %v1316
    %v1396 = vmul.f32 %v1257, %v1320
    %v1397 = vmul.f32 %v1258, %v1316
    %v1398 = vmul.f32 %v1259, %v1320
    %v1399 = vmul.f32 %v1260, %v1316
    %v1400 = vmul.f32 %v1261, %v1320
    %v1401 = vmul.f32 %v1262, %v1316
    %v1402 = vmul.f32 %v1263, %v1320
    %v1403 = vmul.f32 %v1264, %v1316
    %v1404 = vmul.f32 %v1265, %v1320
    %v1405 = vmul.f32 %v1266, %v1316
    %v1406 = vmul.f32 %v1267, %v1320
    %v1407 = vmul.f32 %v1268, %v1316
    %v1408 = vmul.f32 %v1269, %v1320
    %v1409 = vmul.f32 %v1270, %v1316
    %v1410 = vmul.f32 %v1271, %v1320
    %v1411 = vmul.f32 %v1272, %v1316
    %v1412 = vmul.f32 %v1273, %v1320
    %v1413 = vmul.f32 %v1274, %v1316
    %v1414 = vmul.f32 %v1275, %v1320
    %v1415 = vmul.f32 %v1276, %v1316
    %v1416 = vmul.f32 %v1277, %v1320
    %v1417 = vmul.f32 %v1278, %v1316
    %v1418 = vmul.f32 %v1279, %v1320
    %v1419 = vmul.f32 %v1280, %v1316
    %v1420 = vmul.f32 %v1281, %v1320
    %v1421 = vmul.f32 %v1282, %v1316
    %v1422 = vmul.f32 %v1283, %v1320
    %v1423 = vmul.f32 %v1284, %v1316
    %v1424 = vmul.f32 %v1285, %v1320
    %v1425 = vmul.f32 %v1286, %v1316
    %v1426 = vmul.f32 %v1287, %v1320
    %v1427 = vmul.f32 %v1288, %v1316
    %v1428 = vmul.f32 %v1289, %v1320
    %v1429 = vmul.f32 %v1290, %v1316
    %v1430 = vmul.f32 %v1291, %v1320
    %v1431 = vmul.f32 %v1292, %v1316
    %v1432 = vmul.f32 %v1293, %v1320
    %v1433 = vmul.f32 %v1294, %v1316
    %v1434 = vmul.f32 %v1295, %v1320
    %v1435 = vmul.f32 %v1296, %v1316
    %v1436 = vmul.f32 %v1297, %v1320
    %v1437 = vmul.f32 %v1298, %v1316
    %v1438 = vmul.f32 %v1299, %v1320
    %v1439 = vmul.f32 %v1300, %v1316
    %v1440 = vmul.f32 %v1301, %v1320
    %v1441 = vmul.f32 %v1302, %v1316
    %v1442 = vmul.f32 %v1303, %v1320
    %v1443 = vmul.f32 %v1304, %v1316
    %v1444 = vmul.f32 %v1305, %v1320
    %v1445 = vmul.f32 %v1306, %v1316
    %v1446 = vmul.f32 %v1307, %v1320
    %v1447 = vmul.f32 %v1308, %v1316
    %v1448 = vmul.f32 %v1309, %v1320
    %v1449 = vmul.f32 %v1310, %v1316
    %v1450 = vmul.f32 %v1311, %v1320
    %v1452 = vlaneseq
    %v1453 = vshrl.u32 %v1452, 7
    %v1454 = vsub.s32 0, %v1453
    %v1455 = vrot.slane %v158, %v1454
    %v1456 = vlaneseq
    %v1457 = vshrl.u32 %v1456, 7
    %v1458 = vsub.s32 1, %v1457
    %v1459 = vrot.slane %v158, %v1458
    %v1462 = vadd.f32 %v1323, %v1455
    %v1463 = vadd.f32 %v1324, %v1459
    %v1464 = vadd.f32 %v1325, %v1455
    %v1465 = vadd.f32 %v1326, %v1459
    %v1466 = vadd.f32 %v1327, %v1455
    %v1467 = vadd.f32 %v1328, %v1459
    %v1468 = vadd.f32 %v1329, %v1455
    %v1469 = vadd.f32 %v1330, %v1459
    %v1470 = vadd.f32 %v1331, %v1455
    %v1471 = vadd.f32 %v1332, %v1459
    %v1472 = vadd.f32 %v1333, %v1455
    %v1473 = vadd.f32 %v1334, %v1459
    %v1474 = vadd.f32 %v1335, %v1455
    %v1475 = vadd.f32 %v1336, %v1459
    %v1476 = vadd.f32 %v1337, %v1455
    %v1477 = vadd.f32 %v1338, %v1459
    %v1478 = vadd.f32 %v1339, %v1455
    %v1479 = vadd.f32 %v1340, %v1459
    %v1480 = vadd.f32 %v1341, %v1455
    %v1481 = vadd.f32 %v1342, %v1459
    %v1482 = vadd.f32 %v1343, %v1455
    %v1483 = vadd.f32 %v1344, %v1459
    %v1484 = vadd.f32 %v1345, %v1455
    %v1485 = vadd.f32 %v1346, %v1459
    %v1486 = vadd.f32 %v1347, %v1455
    %v1487 = vadd.f32 %v1348, %v1459
    %v1488 = vadd.f32 %v1349, %v1455
    %v1489 = vadd.f32 %v1350, %v1459
    %v1490 = vadd.f32 %v1351, %v1455
    %v1491 = vadd.f32 %v1352, %v1459
    %v1492 = vadd.f32 %v1353, %v1455
    %v1493 = vadd.f32 %v1354, %v1459
    %v1494 = vadd.f32 %v1355, %v1455
    %v1495 = vadd.f32 %v1356, %v1459
    %v1496 = vadd.f32 %v1357, %v1455
    %v1497 = vadd.f32 %v1358, %v1459
    %v1498 = vadd.f32 %v1359, %v1455
    %v1499 = vadd.f32 %v1360, %v1459
    %v1500 = vadd.f32 %v1361, %v1455
    %v1501 = vadd.f32 %v1362, %v1459
    %v1502 = vadd.f32 %v1363, %v1455
    %v1503 = vadd.f32 %v1364, %v1459
    %v1504 = vadd.f32 %v1365, %v1455
    %v1505 = vadd.f32 %v1366, %v1459
    %v1506 = vadd.f32 %v1367, %v1455
    %v1507 = vadd.f32 %v1368, %v1459
    %v1508 = vadd.f32 %v1369, %v1455
    %v1509 = vadd.f32 %v1370, %v1459
    %v1510 = vadd.f32 %v1371, %v1455
    %v1511 = vadd.f32 %v1372, %v1459
    %v1512 = vadd.f32 %v1373, %v1455
    %v1513 = vadd.f32 %v1374, %v1459
    %v1514 = vadd.f32 %v1375, %v1455
    %v1515 = vadd.f32 %v1376, %v1459
    %v1516 = vadd.f32 %v1377, %v1455
    %v1517 = vadd.f32 %v1378, %v1459
    %v1518 = vadd.f32 %v1379, %v1455
    %v1519 = vadd.f32 %v1380, %v1459
    %v1520 = vadd.f32 %v1381, %v1455
    %v1521 = vadd.f32 %v1382, %v1459
    %v1522 = vadd.f32 %v1383, %v1455
    %v1523 = vadd.f32 %v1384, %v1459
    %v1524 = vadd.f32 %v1385, %v1455
    %v1525 = vadd.f32 %v1386, %v1459
    %v1526 = vadd.f32 %v1387, %v1455
    %v1527 = vadd.f32 %v1388, %v1459
    %v1528 = vadd.f32 %v1389, %v1455
    %v1529 = vadd.f32 %v1390, %v1459
    %v1530 = vadd.f32 %v1391, %v1455
    %v1531 = vadd.f32 %v1392, %v1459
    %v1532 = vadd.f32 %v1393, %v1455
    %v1533 = vadd.f32 %v1394, %v1459
    %v1534 = vadd.f32 %v1395, %v1455
    %v1535 = vadd.f32 %v1396, %v1459
    %v1536 = vadd.f32 %v1397, %v1455
    %v1537 = vadd.f32 %v1398, %v1459
    %v1538 = vadd.f32 %v1399, %v1455
    %v1539 = vadd.f32 %v1400, %v1459
    %v1540 = vadd.f32 %v1401, %v1455
    %v1541 = vadd.f32 %v1402, %v1459
    %v1542 = vadd.f32 %v1403, %v1455
    %v1543 = vadd.f32 %v1404, %v1459
    %v1544 = vadd.f32 %v1405, %v1455
    %v1545 = vadd.f32 %v1406, %v1459
    %v1546 = vadd.f32 %v1407, %v1455
    %v1547 = vadd.f32 %v1408, %v1459
    %v1548 = vadd.f32 %v1409, %v1455
    %v1549 = vadd.f32 %v1410, %v1459
    %v1550 = vadd.f32 %v1411, %v1455
    %v1551 = vadd.f32 %v1412, %v1459
    %v1552 = vadd.f32 %v1413, %v1455
    %v1553 = vadd.f32 %v1414, %v1459
    %v1554 = vadd.f32 %v1415, %v1455
    %v1555 = vadd.f32 %v1416, %v1459
    %v1556 = vadd.f32 %v1417, %v1455
    %v1557 = vadd.f32 %v1418, %v1459
    %v1558 = vadd.f32 %v1419, %v1455
    %v1559 = vadd.f32 %v1420, %v1459
    %v1560 = vadd.f32 %v1421, %v1455
    %v1561 = vadd.f32 %v1422, %v1459
    %v1562 = vadd.f32 %v1423, %v1455
    %v1563 = vadd.f32 %v1424, %v1459
    %v1564 = vadd.f32 %v1425, %v1455
    %v1565 = vadd.f32 %v1426, %v1459
    %v1566 = vadd.f32 %v1427, %v1455
    %v1567 = vadd.f32 %v1428, %v1459
    %v1568 = vadd.f32 %v1429, %v1455
    %v1569 = vadd.f32 %v1430, %v1459
    %v1570 = vadd.f32 %v1431, %v1455
    %v1571 = vadd.f32 %v1432, %v1459
    %v1572 = vadd.f32 %v1433, %v1455
    %v1573 = vadd.f32 %v1434, %v1459
    %v1574 = vadd.f32 %v1435, %v1455
    %v1575 = vadd.f32 %v1436, %v1459
    %v1576 = vadd.f32 %v1437, %v1455
    %v1577 = vadd.f32 %v1438, %v1459
    %v1578 = vadd.f32 %v1439, %v1455
    %v1579 = vadd.f32 %v1440, %v1459
    %v1580 = vadd.f32 %v1441, %v1455
    %v1581 = vadd.f32 %v1442, %v1459
    %v1582 = vadd.f32 %v1443, %v1455
    %v1583 = vadd.f32 %v1444, %v1459
    %v1584 = vadd.f32 %v1445, %v1455
    %v1585 = vadd.f32 %v1446, %v1459
    %v1586 = vadd.f32 %v1447, %v1455
    %v1587 = vadd.f32 %v1448, %v1459
    %v1588 = vadd.f32 %v1449, %v1455
    %v1589 = vadd.f32 %v1450, %v1459
    %1590 = vst [vmem:[#allocation5] sm:$0xff] %v1462
    %1591 = vst [vmem:[#allocation5 + $0x8] sm:$0xff] %v1463
    %1592 = vst [vmem:[#allocation5 + $0x10] sm:$0xff] %v1464
    %1593 = vst [vmem:[#allocation5 + $0x18] sm:$0xff] %v1465
    %1594 = vst [vmem:[#allocation5 + $0x20] sm:$0xff] %v1466
    %1595 = vst [vmem:[#allocation5 + $0x28] sm:$0xff] %v1467
    %1596 = vst [vmem:[#allocation5 + $0x30] sm:$0xff] %v1468
    %1597 = vst [vmem:[#allocation5 + $0x38] sm:$0xff] %v1469
    %1598 = vst [vmem:[#allocation5 + $0x40] sm:$0xff] %v1470
    %1599 = vst [vmem:[#allocation5 + $0x48] sm:$0xff] %v1471
    %1600 = vst [vmem:[#allocation5 + $0x50] sm:$0xff] %v1472
    %1601 = vst [vmem:[#allocation5 + $0x58] sm:$0xff] %v1473
    %1602 = vst [vmem:[#allocation5 + $0x60] sm:$0xff] %v1474
    %1603 = vst [vmem:[#allocation5 + $0x68] sm:$0xff] %v1475
    %1604 = vst [vmem:[#allocation5 + $0x70] sm:$0xff] %v1476
    %1605 = vst [vmem:[#allocation5 + $0x78] sm:$0xff] %v1477
    %1606 = vst [vmem:[#allocation5 + $0x80] sm:$0xff] %v1478
    %1607 = vst [vmem:[#allocation5 + $0x88] sm:$0xff] %v1479
    %1608 = vst [vmem:[#allocation5 + $0x90] sm:$0xff] %v1480
    %1609 = vst [vmem:[#allocation5 + $0x98] sm:$0xff] %v1481
    %1610 = vst [vmem:[#allocation5 + $0xa0] sm:$0xff] %v1482
    %1611 = vst [vmem:[#allocation5 + $0xa8] sm:$0xff] %v1483
    %1612 = vst [vmem:[#allocation5 + $0xb0] sm:$0xff] %v1484
    %1613 = vst [vmem:[#allocation5 + $0xb8] sm:$0xff] %v1485
    %1614 = vst [vmem:[#allocation5 + $0xc0] sm:$0xff] %v1486
    %1615 = vst [vmem:[#allocation5 + $0xc8] sm:$0xff] %v1487
    %1616 = vst [vmem:[#allocation5 + $0xd0] sm:$0xff] %v1488
    %1617 = vst [vmem:[#allocation5 + $0xd8] sm:$0xff] %v1489
    %1618 = vst [vmem:[#allocation5 + $0xe0] sm:$0xff] %v1490
    %1619 = vst [vmem:[#allocation5 + $0xe8] sm:$0xff] %v1491
    %1620 = vst [vmem:[#allocation5 + $0xf0] sm:$0xff] %v1492
    %1621 = vst [vmem:[#allocation5 + $0xf8] sm:$0xff] %v1493
    %1622 = vst [vmem:[#allocation5 + $0x100] sm:$0xff] %v1494
    %1623 = vst [vmem:[#allocation5 + $0x108] sm:$0xff] %v1495
    %1624 = vst [vmem:[#allocation5 + $0x110] sm:$0xff] %v1496
    %1625 = vst [vmem:[#allocation5 + $0x118] sm:$0xff] %v1497
    %1626 = vst [vmem:[#allocation5 + $0x120] sm:$0xff] %v1498
    %1627 = vst [vmem:[#allocation5 + $0x128] sm:$0xff] %v1499
    %1628 = vst [vmem:[#allocation5 + $0x130] sm:$0xff] %v1500
    %1629 = vst [vmem:[#allocation5 + $0x138] sm:$0xff] %v1501
    %1630 = vst [vmem:[#allocation5 + $0x140] sm:$0xff] %v1502
    %1631 = vst [vmem:[#allocation5 + $0x148] sm:$0xff] %v1503
    %1632 = vst [vmem:[#allocation5 + $0x150] sm:$0xff] %v1504
    %1633 = vst [vmem:[#allocation5 + $0x158] sm:$0xff] %v1505
    %1634 = vst [vmem:[#allocation5 + $0x160] sm:$0xff] %v1506
    %1635 = vst [vmem:[#allocation5 + $0x168] sm:$0xff] %v1507
    %1636 = vst [vmem:[#allocation5 + $0x170] sm:$0xff] %v1508
    %1637 = vst [vmem:[#allocation5 + $0x178] sm:$0xff] %v1509
    %1638 = vst [vmem:[#allocation5 + $0x180] sm:$0xff] %v1510
    %1639 = vst [vmem:[#allocation5 + $0x188] sm:$0xff] %v1511
    %1640 = vst [vmem:[#allocation5 + $0x190] sm:$0xff] %v1512
    %1641 = vst [vmem:[#allocation5 + $0x198] sm:$0xff] %v1513
    %1642 = vst [vmem:[#allocation5 + $0x1a0] sm:$0xff] %v1514
    %1643 = vst [vmem:[#allocation5 + $0x1a8] sm:$0xff] %v1515
    %1644 = vst [vmem:[#allocation5 + $0x1b0] sm:$0xff] %v1516
    %1645 = vst [vmem:[#allocation5 + $0x1b8] sm:$0xff] %v1517
    %1646 = vst [vmem:[#allocation5 + $0x1c0] sm:$0xff] %v1518
    %1647 = vst [vmem:[#allocation5 + $0x1c8] sm:$0xff] %v1519
    %1648 = vst [vmem:[#allocation5 + $0x1d0] sm:$0xff] %v1520
    %1649 = vst [vmem:[#allocation5 + $0x1d8] sm:$0xff] %v1521
    %1650 = vst [vmem:[#allocation5 + $0x1e0] sm:$0xff] %v1522
    %1651 = vst [vmem:[#allocation5 + $0x1e8] sm:$0xff] %v1523
    %1652 = vst [vmem:[#allocation5 + $0x1f0] sm:$0xff] %v1524
    %1653 = vst [vmem:[#allocation5 + $0x1f8] sm:$0xff] %v1525
    %1654 = vst [vmem:[#allocation5 + $0x200] sm:$0xff] %v1526
    %1655 = vst [vmem:[#allocation5 + $0x208] sm:$0xff] %v1527
    %1656 = vst [vmem:[#allocation5 + $0x210] sm:$0xff] %v1528
    %1657 = vst [vmem:[#allocation5 + $0x218] sm:$0xff] %v1529
    %1658 = vst [vmem:[#allocation5 + $0x220] sm:$0xff] %v1530
    %1659 = vst [vmem:[#allocation5 + $0x228] sm:$0xff] %v1531
    %1660 = vst [vmem:[#allocation5 + $0x230] sm:$0xff] %v1532
    %1661 = vst [vmem:[#allocation5 + $0x238] sm:$0xff] %v1533
    %1662 = vst [vmem:[#allocation5 + $0x240] sm:$0xff] %v1534
    %1663 = vst [vmem:[#allocation5 + $0x248] sm:$0xff] %v1535
    %1664 = vst [vmem:[#allocation5 + $0x250] sm:$0xff] %v1536
    %1665 = vst [vmem:[#allocation5 + $0x258] sm:$0xff] %v1537
    %1666 = vst [vmem:[#allocation5 + $0x260] sm:$0xff] %v1538
    %1667 = vst [vmem:[#allocation5 + $0x268] sm:$0xff] %v1539
    %1668 = vst [vmem:[#allocation5 + $0x270] sm:$0xff] %v1540
    %1669 = vst [vmem:[#allocation5 + $0x278] sm:$0xff] %v1541
    %1670 = vst [vmem:[#allocation5 + $0x280] sm:$0xff] %v1542
    %1671 = vst [vmem:[#allocation5 + $0x288] sm:$0xff] %v1543
    %1672 = vst [vmem:[#allocation5 + $0x290] sm:$0xff] %v1544
    %1673 = vst [vmem:[#allocation5 + $0x298] sm:$0xff] %v1545
    %1674 = vst [vmem:[#allocation5 + $0x2a0] sm:$0xff] %v1546
    %1675 = vst [vmem:[#allocation5 + $0x2a8] sm:$0xff] %v1547
    %1676 = vst [vmem:[#allocation5 + $0x2b0] sm:$0xff] %v1548
    %1677 = vst [vmem:[#allocation5 + $0x2b8] sm:$0xff] %v1549
    %1678 = vst [vmem:[#allocation5 + $0x2c0] sm:$0xff] %v1550
    %1679 = vst [vmem:[#allocation5 + $0x2c8] sm:$0xff] %v1551
    %1680 = vst [vmem:[#allocation5 + $0x2d0] sm:$0xff] %v1552
    %1681 = vst [vmem:[#allocation5 + $0x2d8] sm:$0xff] %v1553
    %1682 = vst [vmem:[#allocation5 + $0x2e0] sm:$0xff] %v1554
    %1683 = vst [vmem:[#allocation5 + $0x2e8] sm:$0xff] %v1555
    %1684 = vst [vmem:[#allocation5 + $0x2f0] sm:$0xff] %v1556
    %1685 = vst [vmem:[#allocation5 + $0x2f8] sm:$0xff] %v1557
    %1686 = vst [vmem:[#allocation5 + $0x300] sm:$0xff] %v1558
    %1687 = vst [vmem:[#allocation5 + $0x308] sm:$0xff] %v1559
    %1688 = vst [vmem:[#allocation5 + $0x310] sm:$0xff] %v1560
    %1689 = vst [vmem:[#allocation5 + $0x318] sm:$0xff] %v1561
    %1690 = vst [vmem:[#allocation5 + $0x320] sm:$0xff] %v1562
    %1691 = vst [vmem:[#allocation5 + $0x328] sm:$0xff] %v1563
    %1692 = vst [vmem:[#allocation5 + $0x330] sm:$0xff] %v1564
    %1693 = vst [vmem:[#allocation5 + $0x338] sm:$0xff] %v1565
    %1694 = vst [vmem:[#allocation5 + $0x340] sm:$0xff] %v1566
    %1695 = vst [vmem:[#allocation5 + $0x348] sm:$0xff] %v1567
    %1696 = vst [vmem:[#allocation5 + $0x350] sm:$0xff] %v1568
    %1697 = vst [vmem:[#allocation5 + $0x358] sm:$0xff] %v1569
    %1698 = vst [vmem:[#allocation5 + $0x360] sm:$0xff] %v1570
    %1699 = vst [vmem:[#allocation5 + $0x368] sm:$0xff] %v1571
    %1700 = vst [vmem:[#allocation5 + $0x370] sm:$0xff] %v1572
    %1701 = vst [vmem:[#allocation5 + $0x378] sm:$0xff] %v1573
    %1702 = vst [vmem:[#allocation5 + $0x380] sm:$0xff] %v1574
    %1703 = vst [vmem:[#allocation5 + $0x388] sm:$0xff] %v1575
    %1704 = vst [vmem:[#allocation5 + $0x390] sm:$0xff] %v1576
    %1705 = vst [vmem:[#allocation5 + $0x398] sm:$0xff] %v1577
    %1706 = vst [vmem:[#allocation5 + $0x3a0] sm:$0xff] %v1578
    %1707 = vst [vmem:[#allocation5 + $0x3a8] sm:$0xff] %v1579
    %1708 = vst [vmem:[#allocation5 + $0x3b0] sm:$0xff] %v1580
    %1709 = vst [vmem:[#allocation5 + $0x3b8] sm:$0xff] %v1581
    %1710 = vst [vmem:[#allocation5 + $0x3c0] sm:$0xff] %v1582
    %1711 = vst [vmem:[#allocation5 + $0x3c8] sm:$0xff] %v1583
    %1712 = vst [vmem:[#allocation5 + $0x3d0] sm:$0xff] %v1584
    %1713 = vst [vmem:[#allocation5 + $0x3d8] sm:$0xff] %v1585
    %1714 = vst [vmem:[#allocation5 + $0x3e0] sm:$0xff] %v1586
    %1715 = vst [vmem:[#allocation5 + $0x3e8] sm:$0xff] %v1587
    %1716 = vst [vmem:[#allocation5 + $0x3f0] sm:$0xff] %v1588
    %1717 = vst [vmem:[#allocation5 + $0x3f8] sm:$0xff] %v1589
    // Predicated region
    $region18: #{tpu_custom_call.1} parent=1 // pred_check
      _
    $region19: #{tpu_custom_call.1} parent=1 // pred_check_branch
      %1719 = sbr.rel (0) target = $region21
    $region20: #{tpu_custom_call.1} parent=1 // pred_region
      %s1721 = ssub.s32 16384, 16384
      %1722 = vsyncadd [#allocation4], %s1721
      %s1723 = sshll.u32 [#allocation5], 4
      %s1724 = int_to_ptr.vmem [resolvable:$true] %s1723
      %1729 = dma.vmem_to_hbm [thread:$0]  %s1724, 16384, %s3, [#allocation4], 256, 256, 16
    $region21: #{tpu_custom_call.1} parent=1 // pred_fallthru
      _
    // Predicated region
    $region22: #{tpu_custom_call.1} parent=1 // pred_check
      _
    $region23: #{tpu_custom_call.1} parent=1 // pred_check_branch
      %1731 = sbr.rel (0) target = $region25
    $region24: #{tpu_custom_call.1} parent=1 // pred_region
      %1732 = dma.done [#allocation4], 16384
    $region25: #{tpu_custom_call.1} parent=1 // pred_fallthru
      _
    %1733 = vsyncpa [#allocation3], 1
    %1734 = vsyncpa [#allocation4], 1

</llo_original>
